<compile_context>
chip_gen: v7x
topology: tpu7x:2x2x1
jax: 0.10.0
libtpu: 0.0.40
codegen_flags: <defaults>
</compile_context>

<pallas_src>
import functools
import numpy as np
import jax
import jax.numpy as jnp
from jax.experimental import pallas as pl
from jax.experimental.pallas import tpu as pltpu

KD = 3  # synthetic denoiser conv size (stand-in for the external DRUNet `model`)


def _pnp_fused_kernel(k1_ref, k2_ref, dl_ref, df_ref,      # SMEM taps
                      y0_ref, cplane_ref, cmap_ref,        # VMEM constant planes
                      w_ref,                               # output (doubles as y storage)
                      *, H, W, L, nb):
    ch = L // 2
    rc = KD // 2

    # ---- loop-invariant scalar taps: load from SMEM once, before the iteration loop.
    k1 = [k1_ref[i] for i in range(L * L)]     # PSF taps (conv pass)
    k2 = [k2_ref[i] for i in range(L * L)]     # -0.1*lamb * PSF taps (corr pass)
    dl = [dl_ref[i] for i in range(KD * KD)]   # 0.1 * denoiser ch-0 taps (loop)
    df = [df_ref[i] for i in range(KD * KD)]   # denoiser ch-0 taps (final w)

    # ---- loop-invariant border masks for the zero-padded 3x3 denoiser conv.
    row = jax.lax.broadcasted_iota(jnp.int32, (H, W), 0)
    col = jax.lax.broadcasted_iota(jnp.int32, (H, W), 1)
    col_ok = {q: (col < W - q) if q > 0 else (col >= -q) for q in (-1, 1)}
    row_ok = {p: (row < H - p) if p > 0 else (row >= -p) for p in (-1, 1)}

    def wrap_stencil(x, taps, sign):
        # result[i,j] = sum_{a,b} taps[a*L+b] * x[(i - sign*(a-ch)) % H,
        #                                          (j - sign*(b-ch)) % W]
        # sign=+1 -> circular convolution with the PSF  ( ifft(F(k) * F(x)) )
        # sign=-1 -> circular correlation with the PSF  ( ifft(conj(F(k)) * F(x)) )
        # Hoisted rolls: one lane roll per column offset b, L partial sums, then one
        # sublane roll per row offset a  ->  2L-2 nontrivial rolls per pass.
        # TODO(synk): the inner b-loop could be a WxW banded-circulant matmul on the
        # (currently idle) MXU for production-size W; skipped pending precision checks.
        partial = [None] * L
        for b in range(L):
            db = (sign * (b - ch)) % W
            xc = pltpu.roll(x, db, 1) if db else x
            for a in range(L):
                t = taps[a * L + b] * xc
                partial[a] = t if partial[a] is None else partial[a] + t
        out = None
        for a in range(L):
            da = (sign * (a - ch)) % H
            pa = pltpu.roll(partial[a], da, 0) if da else partial[a]
            out = pa if out is None else out + pa
        return out

    def denoise(x, taps, base):
        # zero-padded 3x3 conv of x (denoiser channel-0 taps) + constant plane `base`
        # (channel-1 sigma plane, bias and any folded constants live in `base`).
        partial = [None] * KD
        for b in range(KD):
            q = b - rc
            xc = pltpu.roll(x, (-q) % W, 1) if q else x
            if q:
                xc = jnp.where(col_ok[q], xc, 0.0)
            for a in range(KD):
                t = taps[a * KD + b] * xc
                partial[a] = t if partial[a] is None else partial[a] + t
        out = base
        for a in range(KD):
            p = a - rc
            pa = partial[a]
            if p:
                pa = pltpu.roll(pa, (-p) % H, 0)
                pa = jnp.where(row_ok[p], pa, 0.0)
            out = out + pa
        return out

    # y lives in the output VMEM buffer across iterations (no extra scratch plane).
    w_ref[...] = y0_ref[...]                 # y0 = f * 255   (torch: u = f after f *= 255)
    cplane = cplane_ref[...]                 # 0.1*cmap + 0.1*lamb*corr_k(f)

    def body(_, carry):
        y = w_ref[...]
        # data term contribution:  -0.1*lamb * corr_k(conv_k(y))   (scale folded into k2)
        s = wrap_stencil(wrap_stencil(y, k1, +1), k2, -1)
        # denoiser contribution + folded constants:  0.1*D(y) + cplane
        d = denoise(y, dl, cplane)
        # y <- y - 0.1*(y - w + lamb*temp)  ==  0.9*y + d + s
        w_ref[...] = 0.9 * y + d + s
        return carry

    jax.lax.fori_loop(0, nb - 1, body, 0)

    # last iteration only needs the returned value:  w = D(y_last) + cmap
    w_ref[...] = denoise(w_ref[...], df, cmap_ref[...])


def _make_pnp_call(H, W, L, nb):
    kern = functools.partial(_pnp_fused_kernel, H=H, W=W, L=L, nb=int(nb))
    flops = int(nb) * H * W * (4 * L * L + 4 * KD * KD + 10)
    bytes_accessed = 4 * H * W * 4 + 4 * (2 * L * L + 2 * KD * KD)
    # size scoped VMEM from the image size (resident planes + stencil partials + slack)
    vmem_bytes = int(min(128 * 1024 * 1024, max(8 * 1024 * 1024, 24 * H * W * 4)))
    smem = pl.BlockSpec(memory_space=pltpu.MemorySpace.SMEM)
    vmem = pl.BlockSpec(memory_space=pltpu.MemorySpace.VMEM)
    # TODO(synk): for batched inputs on v7x, add a leading 'parallel' grid axis over
    # images so the second TensorCore is used; the demo runs a single plane.
    return pl.pallas_call(
        kern,
        out_shape=jax.ShapeDtypeStruct((H, W), jnp.float32),   # w (denoised * 255)
        in_specs=[smem, smem, smem, smem,                       # tap vectors
                  vmem, vmem, vmem],                            # y0, cplane, cmap
        out_specs=vmem,
        compiler_params=pltpu.CompilerParams(vmem_limit_bytes=vmem_bytes),
        cost_estimate=pl.CostEstimate(flops=flops, transcendentals=0,
                                      bytes_accessed=int(bytes_accessed)),
    )


def pnp_forward(kernel, initial_uv, f, clean, den_w, den_b,
                sigma=25.5, lamb=690.0, sigma2=1.0, denoisor_sigma=25, nb=5):
    """Mirrors PnP.forward.  `initial_uv`, `sigma`, `sigma2` are unused by the torch
    forward as well; `clean` is only used for PSNR/SSIM bookkeeping."""
    # TODO(synk): get_psnr_i (util.calculate_psnr/ssim, ToPILImage bookkeeping) is
    # external metric logging that does not affect the returned tensor; skipped.
    # TODO(synk): the real DRUNet (`model`) is an external pretrained network; replaced
    # by a deterministic single 3x3 conv (2 -> 1 channels, zero padding) with bias.
    psf = np.asarray(kernel, np.float32).reshape(kernel.shape[-2], kernel.shape[-1])
    f2 = np.asarray(f, np.float32).reshape(f.shape[-2], f.shape[-1]) * 255.0  # f *= 255
    H, W = f2.shape
    L = psf.shape[0]
    step = 0.1

    # ---- host-side constant folding (computed once) -----------------------------------
    # Tf = corr_k(f2) circular  == real(ifft(conj(F(k)) * F(f2)))  with p2o-centered k.
    otf = np.zeros((H, W), np.float32)
    otf[:L, :L] = psf
    otf = np.roll(otf, (-(L // 2), -(L // 2)), axis=(0, 1))
    Fk = np.fft.fftn(otf)
    Tf = np.real(np.fft.ifftn(np.conj(Fk) * np.fft.fftn(f2))).astype(np.float32)

    # cmap = 255 * (bias + zero-padded conv of the constant sigma plane)  (border aware);
    # the /255 on the denoiser input and *255 on its output cancel for channel 0.
    wd = np.asarray(den_w, np.float32).reshape(2, KD, KD)
    bias = float(np.asarray(den_b, np.float32).reshape(()))
    sp = np.pad(np.full((H, W), float(denoisor_sigma), np.float32), 1)
    c1 = np.zeros((H, W), np.float32)
    for a in range(KD):
        for b in range(KD):
            c1 += wd[1, a, b] * sp[a:a + H, b:b + W]
    cmap = ((bias + c1) * 255.0).astype(np.float32)

    # constant plane of the folded update  y <- 0.9 y + 0.1 D(y) - 0.1 lamb S(y) + cplane
    cplane = (step * cmap + step * float(lamb) * Tf).astype(np.float32)

    k1 = jnp.asarray(psf.reshape(-1), jnp.float32)
    k2 = jnp.asarray((-step * float(lamb)) * psf.reshape(-1), jnp.float32)
    dl = jnp.asarray(step * wd[0].reshape(-1), jnp.float32)
    df = jnp.asarray(wd[0].reshape(-1), jnp.float32)

    call = _make_pnp_call(H, W, L, int(nb))
    w = call(k1, k2, dl, df,
             jnp.asarray(f2, jnp.float32),
             jnp.asarray(cplane, jnp.float32),
             jnp.asarray(cmap, jnp.float32))
    return w.reshape(f.shape)  # NCHW


def pnp_forward_reference(kernel, f, den_w, den_b,
                          lamb=690.0, denoisor_sigma=25, nb=5):
    """Pure-JAX reference that mirrors the torch code verbatim (p2o + FFTs)."""
    psf = jnp.asarray(kernel, jnp.float32).reshape(kernel.shape[-2], kernel.shape[-1])
    f2 = jnp.asarray(f, jnp.float32).reshape(f.shape[-2], f.shape[-1]) * 255.0
    H, W = f2.shape
    L = psf.shape[0]
    otf = jnp.zeros((H, W), jnp.float32).at[:L, :L].set(psf)
    otf = jnp.roll(otf, (-(L // 2), -(L // 2)), axis=(0, 1))
    fft_k = jnp.fft.fftn(otf)
    fft_kH = jnp.conj(fft_k)
    abs_k = fft_kH * fft_k
    Wd = jnp.asarray(den_w, jnp.float32).reshape(2, KD, KD)
    bias = jnp.asarray(den_b, jnp.float32).reshape(())
    y = f2
    w = f2
    for _ in range(nb):
        temp = jnp.real(jnp.fft.ifftn(abs_k * jnp.fft.fftn(y) - fft_kH * jnp.fft.fftn(f2)))
        t = y / 255.0
        inp = jnp.stack([t, jnp.full((H, W), float(denoisor_sigma), jnp.float32)], 0)
        ip = jnp.pad(inp, ((0, 0), (1, 1), (1, 1)))
        den = bias + jnp.zeros((H, W), jnp.float32)
        for c in range(2):
            for a in range(KD):
                for b in range(KD):
                    den = den + Wd[c, a, b] * ip[c, a:a + H, b:b + W]
        w = den * 255.0
        G = y - w + lamb * temp
        y = y - 0.1 * G
    return w.reshape(f.shape)


if __name__ == "__main__":
    key = jax.random.PRNGKey(0)
    k1, k2, k3, k4 = jax.random.split(key, 4)

    # Lane-dense demo shape: W is a full 128-lane row, H a multiple of 8 sublanes.
    H, W = 64, 128
    L = 5
    NB = 5  # module default is nb=50; kept small for the demo

    psf = jax.random.uniform(k1, (L, L), jnp.float32)
    psf = psf / jnp.sum(psf)                        # normalized blur kernel
    kernel = psf.reshape(1, 1, L, L)                # NCHW PSF
    f = jax.random.uniform(k2, (1, 1, H, W), jnp.float32)       # observation in [0, 1]
    clean = jax.random.uniform(k3, (1, 1, H, W), jnp.float32)   # only used for metrics
    initial_uv = jnp.zeros((1, 1, H, W), jnp.float32)           # unused by forward

    # deterministic synthetic denoiser parameters (Conv2d(2, 1, 3) weight + bias)
    den_w = jax.random.normal(k4, (2, KD, KD), jnp.float32) * 0.05
    den_b = jnp.full((1,), 0.02, jnp.float32)

    out = pnp_forward(kernel, initial_uv, f, clean, den_w, den_b, nb=NB)
    out = jax.block_until_ready(out)

    ref = pnp_forward_reference(kernel, f, den_w, den_b, nb=NB)
    ref = jax.block_until_ready(ref)

    rel_err = float(jnp.max(jnp.abs(out - ref)) / (jnp.max(jnp.abs(ref)) + 1e-6))
    assert out.shape == (1, 1, H, W)
    assert np.isfinite(np.asarray(out)).all()
    assert rel_err < 5e-3, f"mismatch vs FFT reference, rel_err={rel_err}"
    print("KERNEL_OK")
</pallas_src>

<mosaic_0001>
module attributes {stable_mosaic.version = 11 : i64} {
  func.func @_pnp_fused_kernel(%arg0: memref<25xf32, #tpu.memory_space<smem>>, %arg1: memref<25xf32, #tpu.memory_space<smem>>, %arg2: memref<9xf32, #tpu.memory_space<smem>>, %arg3: memref<9xf32, #tpu.memory_space<smem>>, %arg4: memref<64x128xf32, #tpu.memory_space<vmem>>, %arg5: memref<64x128xf32, #tpu.memory_space<vmem>>, %arg6: memref<64x128xf32, #tpu.memory_space<vmem>>, %arg7: memref<64x128xf32, #tpu.memory_space<vmem>>) attributes {dimension_semantics = [], scalar_prefetch = 0 : i64, scratch_operands = 0 : i64, tpu.core_type = #tpu.core_type<tc>} {
    %c0 = arith.constant 0 : index
    %0 = memref.load %arg0[%c0] : memref<25xf32, #tpu.memory_space<smem>>
    %c1 = arith.constant 1 : index
    %1 = memref.load %arg0[%c1] : memref<25xf32, #tpu.memory_space<smem>>
    %c2 = arith.constant 2 : index
    %2 = memref.load %arg0[%c2] : memref<25xf32, #tpu.memory_space<smem>>
    %c3 = arith.constant 3 : index
    %3 = memref.load %arg0[%c3] : memref<25xf32, #tpu.memory_space<smem>>
    %c4 = arith.constant 4 : index
    %4 = memref.load %arg0[%c4] : memref<25xf32, #tpu.memory_space<smem>>
    %c5 = arith.constant 5 : index
    %5 = memref.load %arg0[%c5] : memref<25xf32, #tpu.memory_space<smem>>
    %c6 = arith.constant 6 : index
    %6 = memref.load %arg0[%c6] : memref<25xf32, #tpu.memory_space<smem>>
    %c7 = arith.constant 7 : index
    %7 = memref.load %arg0[%c7] : memref<25xf32, #tpu.memory_space<smem>>
    %c8 = arith.constant 8 : index
    %8 = memref.load %arg0[%c8] : memref<25xf32, #tpu.memory_space<smem>>
    %c9 = arith.constant 9 : index
    %9 = memref.load %arg0[%c9] : memref<25xf32, #tpu.memory_space<smem>>
    %c10 = arith.constant 10 : index
    %10 = memref.load %arg0[%c10] : memref<25xf32, #tpu.memory_space<smem>>
    %c11 = arith.constant 11 : index
    %11 = memref.load %arg0[%c11] : memref<25xf32, #tpu.memory_space<smem>>
    %c12 = arith.constant 12 : index
    %12 = memref.load %arg0[%c12] : memref<25xf32, #tpu.memory_space<smem>>
    %c13 = arith.constant 13 : index
    %13 = memref.load %arg0[%c13] : memref<25xf32, #tpu.memory_space<smem>>
    %c14 = arith.constant 14 : index
    %14 = memref.load %arg0[%c14] : memref<25xf32, #tpu.memory_space<smem>>
    %c15 = arith.constant 15 : index
    %15 = memref.load %arg0[%c15] : memref<25xf32, #tpu.memory_space<smem>>
    %c16 = arith.constant 16 : index
    %16 = memref.load %arg0[%c16] : memref<25xf32, #tpu.memory_space<smem>>
    %c17 = arith.constant 17 : index
    %17 = memref.load %arg0[%c17] : memref<25xf32, #tpu.memory_space<smem>>
    %c18 = arith.constant 18 : index
    %18 = memref.load %arg0[%c18] : memref<25xf32, #tpu.memory_space<smem>>
    %c19 = arith.constant 19 : index
    %19 = memref.load %arg0[%c19] : memref<25xf32, #tpu.memory_space<smem>>
    %c20 = arith.constant 20 : index
    %20 = memref.load %arg0[%c20] : memref<25xf32, #tpu.memory_space<smem>>
    %c21 = arith.constant 21 : index
    %21 = memref.load %arg0[%c21] : memref<25xf32, #tpu.memory_space<smem>>
    %c22 = arith.constant 22 : index
    %22 = memref.load %arg0[%c22] : memref<25xf32, #tpu.memory_space<smem>>
    %c23 = arith.constant 23 : index
    %23 = memref.load %arg0[%c23] : memref<25xf32, #tpu.memory_space<smem>>
    %c24 = arith.constant 24 : index
    %24 = memref.load %arg0[%c24] : memref<25xf32, #tpu.memory_space<smem>>
    %c0_0 = arith.constant 0 : index
    %25 = memref.load %arg1[%c0_0] : memref<25xf32, #tpu.memory_space<smem>>
    %c1_1 = arith.constant 1 : index
    %26 = memref.load %arg1[%c1_1] : memref<25xf32, #tpu.memory_space<smem>>
    %c2_2 = arith.constant 2 : index
    %27 = memref.load %arg1[%c2_2] : memref<25xf32, #tpu.memory_space<smem>>
    %c3_3 = arith.constant 3 : index
    %28 = memref.load %arg1[%c3_3] : memref<25xf32, #tpu.memory_space<smem>>
    %c4_4 = arith.constant 4 : index
    %29 = memref.load %arg1[%c4_4] : memref<25xf32, #tpu.memory_space<smem>>
    %c5_5 = arith.constant 5 : index
    %30 = memref.load %arg1[%c5_5] : memref<25xf32, #tpu.memory_space<smem>>
    %c6_6 = arith.constant 6 : index
    %31 = memref.load %arg1[%c6_6] : memref<25xf32, #tpu.memory_space<smem>>
    %c7_7 = arith.constant 7 : index
    %32 = memref.load %arg1[%c7_7] : memref<25xf32, #tpu.memory_space<smem>>
    %c8_8 = arith.constant 8 : index
    %33 = memref.load %arg1[%c8_8] : memref<25xf32, #tpu.memory_space<smem>>
    %c9_9 = arith.constant 9 : index
    %34 = memref.load %arg1[%c9_9] : memref<25xf32, #tpu.memory_space<smem>>
    %c10_10 = arith.constant 10 : index
    %35 = memref.load %arg1[%c10_10] : memref<25xf32, #tpu.memory_space<smem>>
    %c11_11 = arith.constant 11 : index
    %36 = memref.load %arg1[%c11_11] : memref<25xf32, #tpu.memory_space<smem>>
    %c12_12 = arith.constant 12 : index
    %37 = memref.load %arg1[%c12_12] : memref<25xf32, #tpu.memory_space<smem>>
    %c13_13 = arith.constant 13 : index
    %38 = memref.load %arg1[%c13_13] : memref<25xf32, #tpu.memory_space<smem>>
    %c14_14 = arith.constant 14 : index
    %39 = memref.load %arg1[%c14_14] : memref<25xf32, #tpu.memory_space<smem>>
    %c15_15 = arith.constant 15 : index
    %40 = memref.load %arg1[%c15_15] : memref<25xf32, #tpu.memory_space<smem>>
    %c16_16 = arith.constant 16 : index
    %41 = memref.load %arg1[%c16_16] : memref<25xf32, #tpu.memory_space<smem>>
    %c17_17 = arith.constant 17 : index
    %42 = memref.load %arg1[%c17_17] : memref<25xf32, #tpu.memory_space<smem>>
    %c18_18 = arith.constant 18 : index
    %43 = memref.load %arg1[%c18_18] : memref<25xf32, #tpu.memory_space<smem>>
    %c19_19 = arith.constant 19 : index
    %44 = memref.load %arg1[%c19_19] : memref<25xf32, #tpu.memory_space<smem>>
    %c20_20 = arith.constant 20 : index
    %45 = memref.load %arg1[%c20_20] : memref<25xf32, #tpu.memory_space<smem>>
    %c21_21 = arith.constant 21 : index
    %46 = memref.load %arg1[%c21_21] : memref<25xf32, #tpu.memory_space<smem>>
    %c22_22 = arith.constant 22 : index
    %47 = memref.load %arg1[%c22_22] : memref<25xf32, #tpu.memory_space<smem>>
    %c23_23 = arith.constant 23 : index
    %48 = memref.load %arg1[%c23_23] : memref<25xf32, #tpu.memory_space<smem>>
    %c24_24 = arith.constant 24 : index
    %49 = memref.load %arg1[%c24_24] : memref<25xf32, #tpu.memory_space<smem>>
    %c0_25 = arith.constant 0 : index
    %50 = memref.load %arg2[%c0_25] : memref<9xf32, #tpu.memory_space<smem>>
    %c1_26 = arith.constant 1 : index
    %51 = memref.load %arg2[%c1_26] : memref<9xf32, #tpu.memory_space<smem>>
    %c2_27 = arith.constant 2 : index
    %52 = memref.load %arg2[%c2_27] : memref<9xf32, #tpu.memory_space<smem>>
    %c3_28 = arith.constant 3 : index
    %53 = memref.load %arg2[%c3_28] : memref<9xf32, #tpu.memory_space<smem>>
    %c4_29 = arith.constant 4 : index
    %54 = memref.load %arg2[%c4_29] : memref<9xf32, #tpu.memory_space<smem>>
    %c5_30 = arith.constant 5 : index
    %55 = memref.load %arg2[%c5_30] : memref<9xf32, #tpu.memory_space<smem>>
    %c6_31 = arith.constant 6 : index
    %56 = memref.load %arg2[%c6_31] : memref<9xf32, #tpu.memory_space<smem>>
    %c7_32 = arith.constant 7 : index
    %57 = memref.load %arg2[%c7_32] : memref<9xf32, #tpu.memory_space<smem>>
    %c8_33 = arith.constant 8 : index
    %58 = memref.load %arg2[%c8_33] : memref<9xf32, #tpu.memory_space<smem>>
    %c0_34 = arith.constant 0 : index
    %59 = memref.load %arg3[%c0_34] : memref<9xf32, #tpu.memory_space<smem>>
    %c1_35 = arith.constant 1 : index
    %60 = memref.load %arg3[%c1_35] : memref<9xf32, #tpu.memory_space<smem>>
    %c2_36 = arith.constant 2 : index
    %61 = memref.load %arg3[%c2_36] : memref<9xf32, #tpu.memory_space<smem>>
    %c3_37 = arith.constant 3 : index
    %62 = memref.load %arg3[%c3_37] : memref<9xf32, #tpu.memory_space<smem>>
    %c4_38 = arith.constant 4 : index
    %63 = memref.load %arg3[%c4_38] : memref<9xf32, #tpu.memory_space<smem>>
    %c5_39 = arith.constant 5 : index
    %64 = memref.load %arg3[%c5_39] : memref<9xf32, #tpu.memory_space<smem>>
    %c6_40 = arith.constant 6 : index
    %65 = memref.load %arg3[%c6_40] : memref<9xf32, #tpu.memory_space<smem>>
    %c7_41 = arith.constant 7 : index
    %66 = memref.load %arg3[%c7_41] : memref<9xf32, #tpu.memory_space<smem>>
    %c8_42 = arith.constant 8 : index
    %67 = memref.load %arg3[%c8_42] : memref<9xf32, #tpu.memory_space<smem>>
    %68 = tpu.iota {dimensions = array<i32: 0>} : vector<64x128xi32>
    %69 = tpu.iota {dimensions = array<i32: 1>} : vector<64x128xi32>
    %c1_i32 = arith.constant 1 : i32
    %70 = vector.broadcast %c1_i32 : i32 to vector<64x128xi32>
    %71 = arith.cmpi sge, %69, %70 : vector<64x128xi32>
    %c127_i32 = arith.constant 127 : i32
    %72 = vector.broadcast %c127_i32 : i32 to vector<64x128xi32>
    %73 = arith.cmpi slt, %69, %72 : vector<64x128xi32>
    %c1_i32_43 = arith.constant 1 : i32
    %74 = vector.broadcast %c1_i32_43 : i32 to vector<64x128xi32>
    %75 = arith.cmpi sge, %68, %74 : vector<64x128xi32>
    %c63_i32 = arith.constant 63 : i32
    %76 = vector.broadcast %c63_i32 : i32 to vector<64x128xi32>
    %77 = arith.cmpi slt, %68, %76 : vector<64x128xi32>
    %c0_44 = arith.constant 0 : index
    %c0_45 = arith.constant 0 : index
    %78 = vector.load %arg4[%c0_44, %c0_45] : memref<64x128xf32, #tpu.memory_space<vmem>>, vector<64x128xf32>
    %c0_46 = arith.constant 0 : index
    %c0_47 = arith.constant 0 : index
    %79 = vector.load %arg7[%c0_46, %c0_47] : memref<64x128xf32, #tpu.memory_space<vmem>>, vector<64x128xf32>
    tpu.vector_store %arg7[%c0_46, %c0_47], %78 {strides = array<i32>} : memref<64x128xf32, #tpu.memory_space<vmem>>, vector<64x128xf32>,
    %c0_48 = arith.constant 0 : index
    %c0_49 = arith.constant 0 : index
    %80 = vector.load %arg5[%c0_48, %c0_49] : memref<64x128xf32, #tpu.memory_space<vmem>>, vector<64x128xf32>
    %c0_i32 = arith.constant 0 : i32
    %c4_i32 = arith.constant 4 : i32
    %81 = arith.addi %c0_i32, %c4_i32 : i32
    %c1_i32_50 = arith.constant 1 : i32
    scf.for %arg8 = %c0_i32 to %81 step %c1_i32_50  : i32 {
      %c0_64 = arith.constant 0 : index
      %c0_65 = arith.constant 0 : index
      %124 = vector.load %arg7[%c0_64, %c0_65] : memref<64x128xf32, #tpu.memory_space<vmem>>, vector<64x128xf32>
      %c126_i32 = arith.constant 126 : i32
      %125 = tpu.dynamic_rotate %124 by %c126_i32 dim 1 : vector<64x128xf32>, i32 -> vector<64x128xf32>
      %126 = vector.broadcast %0 : f32 to vector<64x128xf32>
      %127 = arith.mulf %126, %125 : vector<64x128xf32>
      %128 = vector.broadcast %5 : f32 to vector<64x128xf32>
      %129 = arith.mulf %128, %125 : vector<64x128xf32>
      %130 = vector.broadcast %10 : f32 to vector<64x128xf32>
      %131 = arith.mulf %130, %125 : vector<64x128xf32>
      %132 = vector.broadcast %15 : f32 to vector<64x128xf32>
      %133 = arith.mulf %132, %125 : vector<64x128xf32>
      %134 = vector.broadcast %20 : f32 to vector<64x128xf32>
      %135 = arith.mulf %134, %125 : vector<64x128xf32>
      %c127_i32_66 = arith.constant 127 : i32
      %136 = tpu.dynamic_rotate %124 by %c127_i32_66 dim 1 : vector<64x128xf32>, i32 -> vector<64x128xf32>
      %137 = vector.broadcast %1 : f32 to vector<64x128xf32>
      %138 = arith.mulf %137, %136 : vector<64x128xf32>
      %139 = arith.addf %127, %138 : vector<64x128xf32>
      %140 = vector.broadcast %6 : f32 to vector<64x128xf32>
      %141 = arith.mulf %140, %136 : vector<64x128xf32>
      %142 = arith.addf %129, %141 : vector<64x128xf32>
      %143 = vector.broadcast %11 : f32 to vector<64x128xf32>
      %144 = arith.mulf %143, %136 : vector<64x128xf32>
      %145 = arith.addf %131, %144 : vector<64x128xf32>
      %146 = vector.broadcast %16 : f32 to vector<64x128xf32>
      %147 = arith.mulf %146, %136 : vector<64x128xf32>
      %148 = arith.addf %133, %147 : vector<64x128xf32>
      %149 = vector.broadcast %21 : f32 to vector<64x128xf32>
      %150 = arith.mulf %149, %136 : vector<64x128xf32>
      %151 = arith.addf %135, %150 : vector<64x128xf32>
      %152 = vector.broadcast %2 : f32 to vector<64x128xf32>
      %153 = arith.mulf %152, %124 : vector<64x128xf32>
      %154 = arith.addf %139, %153 : vector<64x128xf32>
      %155 = vector.broadcast %7 : f32 to vector<64x128xf32>
      %156 = arith.mulf %155, %124 : vector<64x128xf32>
      %157 = arith.addf %142, %156 : vector<64x128xf32>
      %158 = vector.broadcast %12 : f32 to vector<64x128xf32>
      %159 = arith.mulf %158, %124 : vector<64x128xf32>
      %160 = arith.addf %145, %159 : vector<64x128xf32>
      %161 = vector.broadcast %17 : f32 to vector<64x128xf32>
      %162 = arith.mulf %161, %124 : vector<64x128xf32>
      %163 = arith.addf %148, %162 : vector<64x128xf32>
      %164 = vector.broadcast %22 : f32 to vector<64x128xf32>
      %165 = arith.mulf %164, %124 : vector<64x128xf32>
      %166 = arith.addf %151, %165 : vector<64x128xf32>
      %c1_i32_67 = arith.constant 1 : i32
      %167 = tpu.dynamic_rotate %124 by %c1_i32_67 dim 1 : vector<64x128xf32>, i32 -> vector<64x128xf32>
      %168 = vector.broadcast %3 : f32 to vector<64x128xf32>
      %169 = arith.mulf %168, %167 : vector<64x128xf32>
      %170 = arith.addf %154, %169 : vector<64x128xf32>
      %171 = vector.broadcast %8 : f32 to vector<64x128xf32>
      %172 = arith.mulf %171, %167 : vector<64x128xf32>
      %173 = arith.addf %157, %172 : vector<64x128xf32>
      %174 = vector.broadcast %13 : f32 to vector<64x128xf32>
      %175 = arith.mulf %174, %167 : vector<64x128xf32>
      %176 = arith.addf %160, %175 : vector<64x128xf32>
      %177 = vector.broadcast %18 : f32 to vector<64x128xf32>
      %178 = arith.mulf %177, %167 : vector<64x128xf32>
      %179 = arith.addf %163, %178 : vector<64x128xf32>
      %180 = vector.broadcast %23 : f32 to vector<64x128xf32>
      %181 = arith.mulf %180, %167 : vector<64x128xf32>
      %182 = arith.addf %166, %181 : vector<64x128xf32>
      %c2_i32 = arith.constant 2 : i32
      %183 = tpu.dynamic_rotate %124 by %c2_i32 dim 1 : vector<64x128xf32>, i32 -> vector<64x128xf32>
      %184 = vector.broadcast %4 : f32 to vector<64x128xf32>
      %185 = arith.mulf %184, %183 : vector<64x128xf32>
      %186 = arith.addf %170, %185 : vector<64x128xf32>
      %187 = vector.broadcast %9 : f32 to vector<64x128xf32>
      %188 = arith.mulf %187, %183 : vector<64x128xf32>
      %189 = arith.addf %173, %188 : vector<64x128xf32>
      %190 = vector.broadcast %14 : f32 to vector<64x128xf32>
      %191 = arith.mulf %190, %183 : vector<64x128xf32>
      %192 = arith.addf %176, %191 : vector<64x128xf32>
      %193 = vector.broadcast %19 : f32 to vector<64x128xf32>
      %194 = arith.mulf %193, %183 : vector<64x128xf32>
      %195 = arith.addf %179, %194 : vector<64x128xf32>
      %196 = vector.broadcast %24 : f32 to vector<64x128xf32>
      %197 = arith.mulf %196, %183 : vector<64x128xf32>
      %198 = arith.addf %182, %197 : vector<64x128xf32>
      %c62_i32 = arith.constant 62 : i32
      %199 = tpu.dynamic_rotate %186 by %c62_i32 dim 0 : vector<64x128xf32>, i32 -> vector<64x128xf32>
      %c63_i32_68 = arith.constant 63 : i32
      %200 = tpu.dynamic_rotate %189 by %c63_i32_68 dim 0 : vector<64x128xf32>, i32 -> vector<64x128xf32>
      %201 = arith.addf %199, %200 : vector<64x128xf32>
      %202 = arith.addf %201, %192 : vector<64x128xf32>
      %c1_i32_69 = arith.constant 1 : i32
      %203 = tpu.dynamic_rotate %195 by %c1_i32_69 dim 0 : vector<64x128xf32>, i32 -> vector<64x128xf32>
      %204 = arith.addf %202, %203 : vector<64x128xf32>
      %c2_i32_70 = arith.constant 2 : i32
      %205 = tpu.dynamic_rotate %198 by %c2_i32_70 dim 0 : vector<64x128xf32>, i32 -> vector<64x128xf32>
      %206 = arith.addf %204, %205 : vector<64x128xf32>
      %c2_i32_71 = arith.constant 2 : i32
      %207 = tpu.dynamic_rotate %206 by %c2_i32_71 dim 1 : vector<64x128xf32>, i32 -> vector<64x128xf32>
      %208 = vector.broadcast %25 : f32 to vector<64x128xf32>
      %209 = arith.mulf %208, %207 : vector<64x128xf32>
      %210 = vector.broadcast %30 : f32 to vector<64x128xf32>
      %211 = arith.mulf %210, %207 : vector<64x128xf32>
      %212 = vector.broadcast %35 : f32 to vector<64x128xf32>
      %213 = arith.mulf %212, %207 : vector<64x128xf32>
      %214 = vector.broadcast %40 : f32 to vector<64x128xf32>
      %215 = arith.mulf %214, %207 : vector<64x128xf32>
      %216 = vector.broadcast %45 : f32 to vector<64x128xf32>
      %217 = arith.mulf %216, %207 : vector<64x128xf32>
      %c1_i32_72 = arith.constant 1 : i32
      %218 = tpu.dynamic_rotate %206 by %c1_i32_72 dim 1 : vector<64x128xf32>, i32 -> vector<64x128xf32>
      %219 = vector.broadcast %26 : f32 to vector<64x128xf32>
      %220 = arith.mulf %219, %218 : vector<64x128xf32>
      %221 = arith.addf %209, %220 : vector<64x128xf32>
      %222 = vector.broadcast %31 : f32 to vector<64x128xf32>
      %223 = arith.mulf %222, %218 : vector<64x128xf32>
      %224 = arith.addf %211, %223 : vector<64x128xf32>
      %225 = vector.broadcast %36 : f32 to vector<64x128xf32>
      %226 = arith.mulf %225, %218 : vector<64x128xf32>
      %227 = arith.addf %213, %226 : vector<64x128xf32>
      %228 = vector.broadcast %41 : f32 to vector<64x128xf32>
      %229 = arith.mulf %228, %218 : vector<64x128xf32>
      %230 = arith.addf %215, %229 : vector<64x128xf32>
      %231 = vector.broadcast %46 : f32 to vector<64x128xf32>
      %232 = arith.mulf %231, %218 : vector<64x128xf32>
      %233 = arith.addf %217, %232 : vector<64x128xf32>
      %234 = vector.broadcast %27 : f32 to vector<64x128xf32>
      %235 = arith.mulf %234, %206 : vector<64x128xf32>
      %236 = arith.addf %221, %235 : vector<64x128xf32>
      %237 = vector.broadcast %32 : f32 to vector<64x128xf32>
      %238 = arith.mulf %237, %206 : vector<64x128xf32>
      %239 = arith.addf %224, %238 : vector<64x128xf32>
      %240 = vector.broadcast %37 : f32 to vector<64x128xf32>
      %241 = arith.mulf %240, %206 : vector<64x128xf32>
      %242 = arith.addf %227, %241 : vector<64x128xf32>
      %243 = vector.broadcast %42 : f32 to vector<64x128xf32>
      %244 = arith.mulf %243, %206 : vector<64x128xf32>
      %245 = arith.addf %230, %244 : vector<64x128xf32>
      %246 = vector.broadcast %47 : f32 to vector<64x128xf32>
      %247 = arith.mulf %246, %206 : vector<64x128xf32>
      %248 = arith.addf %233, %247 : vector<64x128xf32>
      %c127_i32_73 = arith.constant 127 : i32
      %249 = tpu.dynamic_rotate %206 by %c127_i32_73 dim 1 : vector<64x128xf32>, i32 -> vector<64x128xf32>
      %250 = vector.broadcast %28 : f32 to vector<64x128xf32>
      %251 = arith.mulf %250, %249 : vector<64x128xf32>
      %252 = arith.addf %236, %251 : vector<64x128xf32>
      %253 = vector.broadcast %33 : f32 to vector<64x128xf32>
      %254 = arith.mulf %253, %249 : vector<64x128xf32>
      %255 = arith.addf %239, %254 : vector<64x128xf32>
      %256 = vector.broadcast %38 : f32 to vector<64x128xf32>
      %257 = arith.mulf %256, %249 : vector<64x128xf32>
      %258 = arith.addf %242, %257 : vector<64x128xf32>
      %259 = vector.broadcast %43 : f32 to vector<64x128xf32>
      %260 = arith.mulf %259, %249 : vector<64x128xf32>
      %261 = arith.addf %245, %260 : vector<64x128xf32>
      %262 = vector.broadcast %48 : f32 to vector<64x128xf32>
      %263 = arith.mulf %262, %249 : vector<64x128xf32>
      %264 = arith.addf %248, %263 : vector<64x128xf32>
      %c126_i32_74 = arith.constant 126 : i32
      %265 = tpu.dynamic_rotate %206 by %c126_i32_74 dim 1 : vector<64x128xf32>, i32 -> vector<64x128xf32>
      %266 = vector.broadcast %29 : f32 to vector<64x128xf32>
      %267 = arith.mulf %266, %265 : vector<64x128xf32>
      %268 = arith.addf %252, %267 : vector<64x128xf32>
      %269 = vector.broadcast %34 : f32 to vector<64x128xf32>
      %270 = arith.mulf %269, %265 : vector<64x128xf32>
      %271 = arith.addf %255, %270 : vector<64x128xf32>
      %272 = vector.broadcast %39 : f32 to vector<64x128xf32>
      %273 = arith.mulf %272, %265 : vector<64x128xf32>
      %274 = arith.addf %258, %273 : vector<64x128xf32>
      %275 = vector.broadcast %44 : f32 to vector<64x128xf32>
      %276 = arith.mulf %275, %265 : vector<64x128xf32>
      %277 = arith.addf %261, %276 : vector<64x128xf32>
      %278 = vector.broadcast %49 : f32 to vector<64x128xf32>
      %279 = arith.mulf %278, %265 : vector<64x128xf32>
      %280 = arith.addf %264, %279 : vector<64x128xf32>
      %c2_i32_75 = arith.constant 2 : i32
      %281 = tpu.dynamic_rotate %268 by %c2_i32_75 dim 0 : vector<64x128xf32>, i32 -> vector<64x128xf32>
      %c1_i32_76 = arith.constant 1 : i32
      %282 = tpu.dynamic_rotate %271 by %c1_i32_76 dim 0 : vector<64x128xf32>, i32 -> vector<64x128xf32>
      %283 = arith.addf %281, %282 : vector<64x128xf32>
      %284 = arith.addf %283, %274 : vector<64x128xf32>
      %c63_i32_77 = arith.constant 63 : i32
      %285 = tpu.dynamic_rotate %277 by %c63_i32_77 dim 0 : vector<64x128xf32>, i32 -> vector<64x128xf32>
      %286 = arith.addf %284, %285 : vector<64x128xf32>
      %c62_i32_78 = arith.constant 62 : i32
      %287 = tpu.dynamic_rotate %280 by %c62_i32_78 dim 0 : vector<64x128xf32>, i32 -> vector<64x128xf32>
      %288 = arith.addf %286, %287 : vector<64x128xf32>
      %c1_i32_79 = arith.constant 1 : i32
      %289 = tpu.dynamic_rotate %124 by %c1_i32_79 dim 1 : vector<64x128xf32>, i32 -> vector<64x128xf32>
      %cst_80 = arith.constant 0.000000e+00 : f32
      %290 = vector.broadcast %cst_80 : f32 to vector<64x128xf32>
      %291 = arith.select %71, %289, %290 : vector<64x128xi1>, vector<64x128xf32>
      %292 = vector.broadcast %50 : f32 to vector<64x128xf32>
      %293 = arith.mulf %292, %291 : vector<64x128xf32>
      %294 = vector.broadcast %53 : f32 to vector<64x128xf32>
      %295 = arith.mulf %294, %291 : vector<64x128xf32>
      %296 = vector.broadcast %56 : f32 to vector<64x128xf32>
      %297 = arith.mulf %296, %291 : vector<64x128xf32>
      %298 = vector.broadcast %51 : f32 to vector<64x128xf32>
      %299 = arith.mulf %298, %124 : vector<64x128xf32>
      %300 = arith.addf %293, %299 : vector<64x128xf32>
      %301 = vector.broadcast %54 : f32 to vector<64x128xf32>
      %302 = arith.mulf %301, %124 : vector<64x128xf32>
      %303 = arith.addf %295, %302 : vector<64x128xf32>
      %304 = vector.broadcast %57 : f32 to vector<64x128xf32>
      %305 = arith.mulf %304, %124 : vector<64x128xf32>
      %306 = arith.addf %297, %305 : vector<64x128xf32>
      %c127_i32_81 = arith.constant 127 : i32
      %307 = tpu.dynamic_rotate %124 by %c127_i32_81 dim 1 : vector<64x128xf32>, i32 -> vector<64x128xf32>
      %cst_82 = arith.constant 0.000000e+00 : f32
      %308 = vector.broadcast %cst_82 : f32 to vector<64x128xf32>
      %309 = arith.select %73, %307, %308 : vector<64x128xi1>, vector<64x128xf32>
      %310 = vector.broadcast %52 : f32 to vector<64x128xf32>
      %311 = arith.mulf %310, %309 : vector<64x128xf32>
      %312 = arith.addf %300, %311 : vector<64x128xf32>
      %313 = vector.broadcast %55 : f32 to vector<64x128xf32>
      %314 = arith.mulf %313, %309 : vector<64x128xf32>
      %315 = arith.addf %303, %314 : vector<64x128xf32>
      %316 = vector.broadcast %58 : f32 to vector<64x128xf32>
      %317 = arith.mulf %316, %309 : vector<64x128xf32>
      %318 = arith.addf %306, %317 : vector<64x128xf32>
      %c1_i32_83 = arith.constant 1 : i32
      %319 = tpu.dynamic_rotate %312 by %c1_i32_83 dim 0 : vector<64x128xf32>, i32 -> vector<64x128xf32>
      %cst_84 = arith.constant 0.000000e+00 : f32
      %320 = vector.broadcast %cst_84 : f32 to vector<64x128xf32>
      %321 = arith.select %75, %319, %320 : vector<64x128xi1>, vector<64x128xf32>
      %322 = arith.addf %80, %321 : vector<64x128xf32>
      %323 = arith.addf %322, %315 : vector<64x128xf32>
      %c63_i32_85 = arith.constant 63 : i32
      %324 = tpu.dynamic_rotate %318 by %c63_i32_85 dim 0 : vector<64x128xf32>, i32 -> vector<64x128xf32>
      %cst_86 = arith.constant 0.000000e+00 : f32
      %325 = vector.broadcast %cst_86 : f32 to vector<64x128xf32>
      %326 = arith.select %77, %324, %325 : vector<64x128xi1>, vector<64x128xf32>
      %327 = arith.addf %323, %326 : vector<64x128xf32>
      %cst_87 = arith.constant 0.899999976 : f32
      %328 = vector.broadcast %cst_87 : f32 to vector<64x128xf32>
      %329 = arith.mulf %328, %124 : vector<64x128xf32>
      %330 = arith.addf %329, %327 : vector<64x128xf32>
      %331 = arith.addf %330, %288 : vector<64x128xf32>
      %c0_88 = arith.constant 0 : index
      %c0_89 = arith.constant 0 : index
      %332 = vector.load %arg7[%c0_88, %c0_89] : memref<64x128xf32, #tpu.memory_space<vmem>>, vector<64x128xf32>
      tpu.vector_store %arg7[%c0_88, %c0_89], %331 {strides = array<i32>} : memref<64x128xf32, #tpu.memory_space<vmem>>, vector<64x128xf32>,
    }
    %c0_51 = arith.constant 0 : index
    %c0_52 = arith.constant 0 : index
    %82 = vector.load %arg7[%c0_51, %c0_52] : memref<64x128xf32, #tpu.memory_space<vmem>>, vector<64x128xf32>
    %c0_53 = arith.constant 0 : index
    %c0_54 = arith.constant 0 : index
    %83 = vector.load %arg6[%c0_53, %c0_54] : memref<64x128xf32, #tpu.memory_space<vmem>>, vector<64x128xf32>
    %c1_i32_55 = arith.constant 1 : i32
    %84 = tpu.dynamic_rotate %82 by %c1_i32_55 dim 1 : vector<64x128xf32>, i32 -> vector<64x128xf32>
    %cst = arith.constant 0.000000e+00 : f32
    %85 = vector.broadcast %cst : f32 to vector<64x128xf32>
    %86 = arith.select %71, %84, %85 : vector<64x128xi1>, vector<64x128xf32>
    %87 = vector.broadcast %59 : f32 to vector<64x128xf32>
    %88 = arith.mulf %87, %86 : vector<64x128xf32>
    %89 = vector.broadcast %62 : f32 to vector<64x128xf32>
    %90 = arith.mulf %89, %86 : vector<64x128xf32>
    %91 = vector.broadcast %65 : f32 to vector<64x128xf32>
    %92 = arith.mulf %91, %86 : vector<64x128xf32>
    %93 = vector.broadcast %60 : f32 to vector<64x128xf32>
    %94 = arith.mulf %93, %82 : vector<64x128xf32>
    %95 = arith.addf %88, %94 : vector<64x128xf32>
    %96 = vector.broadcast %63 : f32 to vector<64x128xf32>
    %97 = arith.mulf %96, %82 : vector<64x128xf32>
    %98 = arith.addf %90, %97 : vector<64x128xf32>
    %99 = vector.broadcast %66 : f32 to vector<64x128xf32>
    %100 = arith.mulf %99, %82 : vector<64x128xf32>
    %101 = arith.addf %92, %100 : vector<64x128xf32>
    %c127_i32_56 = arith.constant 127 : i32
    %102 = tpu.dynamic_rotate %82 by %c127_i32_56 dim 1 : vector<64x128xf32>, i32 -> vector<64x128xf32>
    %cst_57 = arith.constant 0.000000e+00 : f32
    %103 = vector.broadcast %cst_57 : f32 to vector<64x128xf32>
    %104 = arith.select %73, %102, %103 : vector<64x128xi1>, vector<64x128xf32>
    %105 = vector.broadcast %61 : f32 to vector<64x128xf32>
    %106 = arith.mulf %105, %104 : vector<64x128xf32>
    %107 = arith.addf %95, %106 : vector<64x128xf32>
    %108 = vector.broadcast %64 : f32 to vector<64x128xf32>
    %109 = arith.mulf %108, %104 : vector<64x128xf32>
    %110 = arith.addf %98, %109 : vector<64x128xf32>
    %111 = vector.broadcast %67 : f32 to vector<64x128xf32>
    %112 = arith.mulf %111, %104 : vector<64x128xf32>
    %113 = arith.addf %101, %112 : vector<64x128xf32>
    %c1_i32_58 = arith.constant 1 : i32
    %114 = tpu.dynamic_rotate %107 by %c1_i32_58 dim 0 : vector<64x128xf32>, i32 -> vector<64x128xf32>
    %cst_59 = arith.constant 0.000000e+00 : f32
    %115 = vector.broadcast %cst_59 : f32 to vector<64x128xf32>
    %116 = arith.select %75, %114, %115 : vector<64x128xi1>, vector<64x128xf32>
    %117 = arith.addf %83, %116 : vector<64x128xf32>
    %118 = arith.addf %117, %110 : vector<64x128xf32>
    %c63_i32_60 = arith.constant 63 : i32
    %119 = tpu.dynamic_rotate %113 by %c63_i32_60 dim 0 : vector<64x128xf32>, i32 -> vector<64x128xf32>
    %cst_61 = arith.constant 0.000000e+00 : f32
    %120 = vector.broadcast %cst_61 : f32 to vector<64x128xf32>
    %121 = arith.select %77, %119, %120 : vector<64x128xi1>, vector<64x128xf32>
    %122 = arith.addf %118, %121 : vector<64x128xf32>
    %c0_62 = arith.constant 0 : index
    %c0_63 = arith.constant 0 : index
    %123 = vector.load %arg7[%c0_62, %c0_63] : memref<64x128xf32, #tpu.memory_space<vmem>>, vector<64x128xf32>
    tpu.vector_store %arg7[%c0_62, %c0_63], %122 {strides = array<i32>} : memref<64x128xf32, #tpu.memory_space<vmem>>, vector<64x128xf32>,
    return
  }
}

</mosaic_0001>

<llo_original>
// kernel: tpu_custom_call.1
$region0: #{tpu_custom_call.1}
  #allocation0 [shape = 'u32[]', space=smem, size = 0x4, offset = 0x4, fixed_abs, tag = 'smem constant byte address 0x4 - core index']
  #allocation1 [shape = 'u32[144,128]{1,0:T(1,128)}', space=vmem, size = 0x12000, scoped, tag = 'internal scratch']
  %s0 = inlined_call_operand.hbm [shape: f32[25], index: 0, kind: input, shape index: {}]
  %s1 = inlined_call_operand.vmem [shape: f32[25], index: 1, kind: input, shape index: {}]
  %s2 = inlined_call_operand.vmem [shape: f32[9], index: 2, kind: input, shape index: {}]
  %s3 = inlined_call_operand.vmem [shape: f32[9], index: 3, kind: input, shape index: {}]
  %s4 = inlined_call_operand.hbm [shape: f32[64,128], index: 4, kind: input, shape index: {}]
  %s5 = inlined_call_operand.hbm [shape: f32[64,128], index: 5, kind: input, shape index: {}]
  %s6 = inlined_call_operand.hbm [shape: f32[64,128], index: 6, kind: input, shape index: {}]
  %s7 = inlined_call_operand.hbm [shape: f32[64,128], index: 7, kind: output, shape index: {}]
  %s8 = sld [smem:[#allocation0]]
  $region73: #{tpu_custom_call.1} parent=0
    _
  %s10 = ssub.s32 1, %s8
  %s11 = scalar_select 0, %s10, %s8
  $region1: #{tpu_custom_call.1} parent=0
    #allocation2 [shape = 'u8[512]{0}', space=smem, size = 0x200, scoped, tag = 'input window, operand 0, single buffered']
    #allocation3 [shape = 's32[1]{0}', space=sflag, size = 0x4, scoped, tag = 'scoped memory for tpu_custom_call.1']
    #allocation4 [shape = 's32[1]{0}', space=sflag, size = 0x4, scoped, tag = 'scoped memory for tpu_custom_call.1']
    #allocation5 [shape = 's32[1]{0}', space=sflag, size = 0x4, scoped, tag = 'scoped memory for tpu_custom_call.1']
    #allocation6 [shape = 's32[1]{0}', space=sflag, size = 0x4, scoped, tag = 'scoped memory for tpu_custom_call.1']
    #allocation7 [shape = 'u8[512]{0}', space=smem, size = 0x200, scoped, tag = 'input window, operand 1, single buffered']
    #allocation8 [shape = 'u8[512]{0}', space=smem, size = 0x200, scoped, tag = 'input window, operand 2, single buffered']
    #allocation9 [shape = 's32[1]{0}', space=sflag, size = 0x4, scoped, tag = 'scoped memory for tpu_custom_call.1']
    #allocation10 [shape = 'u8[512]{0}', space=smem, size = 0x200, scoped, tag = 'input window, operand 3, single buffered']
    #allocation11 [shape = 'u8[32768]{0}', space=vmem, size = 0x8000, scoped, tag = 'input window, operand 4, single buffered']
    #allocation12 [shape = 'u8[32768]{0}', space=vmem, size = 0x8000, scoped, tag = 'input window, operand 5, single buffered']
    #allocation13 [shape = 's32[1]{0}', space=sflag, size = 0x4, scoped, tag = 'scoped memory for tpu_custom_call.1']
    #allocation14 [shape = 'u8[32768]{0}', space=vmem, size = 0x8000, scoped, tag = 'input window, operand 6, single buffered']
    #allocation15 [shape = 'u8[32768]{0}', space=vmem, size = 0x8000, scoped, tag = 'output window, operand 0, single buffered']
    %12 = vsyncpa [#allocation5], 0
    %13 = vsyncpa [#allocation6], 0
    %14 = vsyncpa [#allocation9], 0
    %15 = vsyncpa [#allocation3], 0
    %16 = vsyncpa [#allocation13], 0
    %17 = vsyncpa [#allocation4], 0
    // Predicated region
    $region2: #{tpu_custom_call.1} parent=1 // pred_check
      _
    $region3: #{tpu_custom_call.1} parent=1 // pred_check_branch
      %19 = sbr.rel (0) target = $region5
    $region4: #{tpu_custom_call.1} parent=1 // pred_region
      %s21 = ssub.s32 16, 16
      %22 = vsyncadd [#allocation5], %s21
      %25 = dma.hbm_to_smem %s0, 16, [#allocation2], [#allocation5]
    $region5: #{tpu_custom_call.1} parent=1 // pred_fallthru
      _
    // Predicated region
    $region6: #{tpu_custom_call.1} parent=1 // pred_check
      _
    $region7: #{tpu_custom_call.1} parent=1 // pred_check_branch
      %27 = sbr.rel (0) target = $region9
    $region8: #{tpu_custom_call.1} parent=1 // pred_region
      %s29 = ssub.s32 16, 16
      %30 = vsyncadd [#allocation6], %s29
      %s32 = sshll.u32 %s1, 4
      %s33 = int_to_ptr.vmem [resolvable:$true] %s32
      %35 = dma.vmem_to_smem %s33, 16, [#allocation7], [#allocation6]
    $region9: #{tpu_custom_call.1} parent=1 // pred_fallthru
      _
    // Predicated region
    $region10: #{tpu_custom_call.1} parent=1 // pred_check
      _
    $region11: #{tpu_custom_call.1} parent=1 // pred_check_branch
      %37 = sbr.rel (0) target = $region13
    $region12: #{tpu_custom_call.1} parent=1 // pred_region
      %s39 = ssub.s32 16, 16
      %40 = vsyncadd [#allocation9], %s39
      %s42 = sshll.u32 %s2, 4
      %s43 = int_to_ptr.vmem [resolvable:$true] %s42
      %45 = dma.vmem_to_smem %s43, 16, [#allocation8], [#allocation9]
    $region13: #{tpu_custom_call.1} parent=1 // pred_fallthru
      _
    // Predicated region
    $region14: #{tpu_custom_call.1} parent=1 // pred_check
      _
    $region15: #{tpu_custom_call.1} parent=1 // pred_check_branch
      %47 = sbr.rel (0) target = $region17
    $region16: #{tpu_custom_call.1} parent=1 // pred_region
      %s49 = ssub.s32 16, 16
      %50 = vsyncadd [#allocation9], %s49
      %s52 = sshll.u32 %s3, 4
      %s53 = int_to_ptr.vmem [resolvable:$true] %s52
      %55 = dma.vmem_to_smem %s53, 16, [#allocation10], [#allocation9]
    $region17: #{tpu_custom_call.1} parent=1 // pred_fallthru
      _
    // Predicated region
    $region18: #{tpu_custom_call.1} parent=1 // pred_check
      _
    $region19: #{tpu_custom_call.1} parent=1 // pred_check_branch
      %57 = sbr.rel (0) target = $region21
    $region20: #{tpu_custom_call.1} parent=1 // pred_region
      %s59 = ssub.s32 1024, 1024
      %60 = vsyncadd [#allocation3], %s59
      %s61 = sshll.u32 [#allocation11], 4
      %s62 = int_to_ptr.vmem [resolvable:$true] %s61
      %67 = dma.hbm_to_vmem [thread:$0]  %s4, 1024, %s62, [#allocation3], 128, 128, 8
    $region21: #{tpu_custom_call.1} parent=1 // pred_fallthru
      _
    // Predicated region
    $region22: #{tpu_custom_call.1} parent=1 // pred_check
      _
    $region23: #{tpu_custom_call.1} parent=1 // pred_check_branch
      %69 = sbr.rel (0) target = $region25
    $region24: #{tpu_custom_call.1} parent=1 // pred_region
      %s71 = ssub.s32 1024, 1024
      %72 = vsyncadd [#allocation13], %s71
      %s73 = sshll.u32 [#allocation12], 4
      %s74 = int_to_ptr.vmem [resolvable:$true] %s73
      %79 = dma.hbm_to_vmem [thread:$0]  %s5, 1024, %s74, [#allocation13], 128, 128, 8
    $region25: #{tpu_custom_call.1} parent=1 // pred_fallthru
      _
    // Predicated region
    $region26: #{tpu_custom_call.1} parent=1 // pred_check
      _
    $region27: #{tpu_custom_call.1} parent=1 // pred_check_branch
      %81 = sbr.rel (0) target = $region29
    $region28: #{tpu_custom_call.1} parent=1 // pred_region
      %s83 = ssub.s32 1024, 1024
      %84 = vsyncadd [#allocation13], %s83
      %s85 = sshll.u32 [#allocation14], 4
      %s86 = int_to_ptr.vmem [resolvable:$true] %s85
      %91 = dma.hbm_to_vmem [thread:$0]  %s6, 1024, %s86, [#allocation13], 128, 128, 8
    $region29: #{tpu_custom_call.1} parent=1 // pred_fallthru
      _
    // Predicated region
    $region30: #{tpu_custom_call.1} parent=1 // pred_check
      _
    $region31: #{tpu_custom_call.1} parent=1 // pred_check_branch
      %93 = sbr.rel (0) target = $region33
    $region32: #{tpu_custom_call.1} parent=1 // pred_region
      %94 = dma.done [#allocation5], 16
    $region33: #{tpu_custom_call.1} parent=1 // pred_fallthru
      _
    // Predicated region
    $region34: #{tpu_custom_call.1} parent=1 // pred_check
      _
    $region35: #{tpu_custom_call.1} parent=1 // pred_check_branch
      %96 = sbr.rel (0) target = $region37
    $region36: #{tpu_custom_call.1} parent=1 // pred_region
      %97 = dma.done [#allocation6], 16
    $region37: #{tpu_custom_call.1} parent=1 // pred_fallthru
      _
    // Predicated region
    $region38: #{tpu_custom_call.1} parent=1 // pred_check
      _
    $region39: #{tpu_custom_call.1} parent=1 // pred_check_branch
      %99 = sbr.rel (0) target = $region41
    $region40: #{tpu_custom_call.1} parent=1 // pred_region
      %100 = dma.done [#allocation9], 16
    $region41: #{tpu_custom_call.1} parent=1 // pred_fallthru
      _
    // Predicated region
    $region42: #{tpu_custom_call.1} parent=1 // pred_check
      _
    $region43: #{tpu_custom_call.1} parent=1 // pred_check_branch
      %102 = sbr.rel (0) target = $region45
    $region44: #{tpu_custom_call.1} parent=1 // pred_region
      %103 = dma.done [#allocation9], 16
    $region45: #{tpu_custom_call.1} parent=1 // pred_fallthru
      _
    // Predicated region
    $region46: #{tpu_custom_call.1} parent=1 // pred_check
      _
    $region47: #{tpu_custom_call.1} parent=1 // pred_check_branch
      %105 = sbr.rel (0) target = $region49
    $region48: #{tpu_custom_call.1} parent=1 // pred_region
      %106 = dma.done [#allocation3], 1024
    $region49: #{tpu_custom_call.1} parent=1 // pred_fallthru
      _
    // Predicated region
    $region50: #{tpu_custom_call.1} parent=1 // pred_check
      _
    $region51: #{tpu_custom_call.1} parent=1 // pred_check_branch
      %108 = sbr.rel (0) target = $region53
    $region52: #{tpu_custom_call.1} parent=1 // pred_region
      %109 = dma.done [#allocation13], 1024
    $region53: #{tpu_custom_call.1} parent=1 // pred_fallthru
      _
    // Predicated region
    $region54: #{tpu_custom_call.1} parent=1 // pred_check
      _
    $region55: #{tpu_custom_call.1} parent=1 // pred_check_branch
      %111 = sbr.rel (0) target = $region57
    $region56: #{tpu_custom_call.1} parent=1 // pred_region
      %112 = dma.done [#allocation13], 1024
    $region57: #{tpu_custom_call.1} parent=1 // pred_fallthru
      _
    %113 = sfence
    %s114 = sld [smem:[#allocation2]]
    %s115 = sld [smem:[#allocation2 + $0x1]]
    %s116 = sld [smem:[#allocation2 + $0x2]]
    %s117 = sld [smem:[#allocation2 + $0x3]]
    %s118 = sld [smem:[#allocation2 + $0x4]]
    %s119 = sld [smem:[#allocation2 + $0x5]]
    %s120 = sld [smem:[#allocation2 + $0x6]]
    %s121 = sld [smem:[#allocation2 + $0x7]]
    %s122 = sld [smem:[#allocation2 + $0x8]]
    %s123 = sld [smem:[#allocation2 + $0x9]]
    %s124 = sld [smem:[#allocation2 + $0xa]]
    %s125 = sld [smem:[#allocation2 + $0xb]]
    %s126 = sld [smem:[#allocation2 + $0xc]]
    %s127 = sld [smem:[#allocation2 + $0xd]]
    %s128 = sld [smem:[#allocation2 + $0xe]]
    %s129 = sld [smem:[#allocation2 + $0xf]]
    %s130 = sld [smem:[#allocation2 + $0x10]]
    %s131 = sld [smem:[#allocation2 + $0x11]]
    %s132 = sld [smem:[#allocation2 + $0x12]]
    %s133 = sld [smem:[#allocation2 + $0x13]]
    %s134 = sld [smem:[#allocation2 + $0x14]]
    %s135 = sld [smem:[#allocation2 + $0x15]]
    %s136 = sld [smem:[#allocation2 + $0x16]]
    %s137 = sld [smem:[#allocation2 + $0x17]]
    %s138 = sld [smem:[#allocation2 + $0x18]]
    %s139 = sld [smem:[#allocation7]]
    %s140 = sld [smem:[#allocation7 + $0x1]]
    %s141 = sld [smem:[#allocation7 + $0x2]]
    %s142 = sld [smem:[#allocation7 + $0x3]]
    %s143 = sld [smem:[#allocation7 + $0x4]]
    %s144 = sld [smem:[#allocation7 + $0x5]]
    %s145 = sld [smem:[#allocation7 + $0x6]]
    %s146 = sld [smem:[#allocation7 + $0x7]]
    %s147 = sld [smem:[#allocation7 + $0x8]]
    %s148 = sld [smem:[#allocation7 + $0x9]]
    %s149 = sld [smem:[#allocation7 + $0xa]]
    %s150 = sld [smem:[#allocation7 + $0xb]]
    %s151 = sld [smem:[#allocation7 + $0xc]]
    %s152 = sld [smem:[#allocation7 + $0xd]]
    %s153 = sld [smem:[#allocation7 + $0xe]]
    %s154 = sld [smem:[#allocation7 + $0xf]]
    %s155 = sld [smem:[#allocation7 + $0x10]]
    %s156 = sld [smem:[#allocation7 + $0x11]]
    %s157 = sld [smem:[#allocation7 + $0x12]]
    %s158 = sld [smem:[#allocation7 + $0x13]]
    %s159 = sld [smem:[#allocation7 + $0x14]]
    %s160 = sld [smem:[#allocation7 + $0x15]]
    %s161 = sld [smem:[#allocation7 + $0x16]]
    %s162 = sld [smem:[#allocation7 + $0x17]]
    %s163 = sld [smem:[#allocation7 + $0x18]]
    %s164 = sld [smem:[#allocation8]]
    %s165 = sld [smem:[#allocation8 + $0x1]]
    %s166 = sld [smem:[#allocation8 + $0x2]]
    %s167 = sld [smem:[#allocation8 + $0x3]]
    %s168 = sld [smem:[#allocation8 + $0x4]]
    %s169 = sld [smem:[#allocation8 + $0x5]]
    %s170 = sld [smem:[#allocation8 + $0x6]]
    %s171 = sld [smem:[#allocation8 + $0x7]]
    %s172 = sld [smem:[#allocation8 + $0x8]]
    %s173 = sld [smem:[#allocation10]]
    %s174 = sld [smem:[#allocation10 + $0x1]]
    %s175 = sld [smem:[#allocation10 + $0x2]]
    %s176 = sld [smem:[#allocation10 + $0x3]]
    %s177 = sld [smem:[#allocation10 + $0x4]]
    %s178 = sld [smem:[#allocation10 + $0x5]]
    %s179 = sld [smem:[#allocation10 + $0x6]]
    %s180 = sld [smem:[#allocation10 + $0x7]]
    %s181 = sld [smem:[#allocation10 + $0x8]]
    %v182 = vlaneseq
    %v183 = vshrl.u32 %v182, 7
    %v184 = vadd.s32 %v183, 8
    %v185 = vadd.s32 %v183, 16
    %v186 = vadd.s32 %v183, 24
    %v187 = vadd.s32 %v183, 32
    %v188 = vadd.s32 %v183, 40
    %v189 = vadd.s32 %v183, 48
    %v190 = vadd.s32 %v183, 56
    %v191 = vlaneseq
    %v192 = vand.u32 %v191, 127
    %vm193 = vcmp.ge.s32.totalorder %v192, 1
    %vm194 = vcmp.lt.s32.totalorder %v192, 127
    %vm195 = vcmp.ge.s32.totalorder %v183, 1
    %vm196 = vcmp.ge.s32.totalorder %v184, 1
    %vm197 = vcmp.ge.s32.totalorder %v185, 1
    %vm198 = vcmp.ge.s32.totalorder %v186, 1
    %vm199 = vcmp.ge.s32.totalorder %v187, 1
    %vm200 = vcmp.ge.s32.totalorder %v188, 1
    %vm201 = vcmp.ge.s32.totalorder %v189, 1
    %vm202 = vcmp.ge.s32.totalorder %v190, 1
    %vm203 = vcmp.lt.s32.totalorder %v183, 63
    %vm204 = vcmp.lt.s32.totalorder %v184, 63
    %vm205 = vcmp.lt.s32.totalorder %v185, 63
    %vm206 = vcmp.lt.s32.totalorder %v186, 63
    %vm207 = vcmp.lt.s32.totalorder %v187, 63
    %vm208 = vcmp.lt.s32.totalorder %v188, 63
    %vm209 = vcmp.lt.s32.totalorder %v189, 63
    %vm210 = vcmp.lt.s32.totalorder %v190, 63
    %v211 = vld [vmem:[#allocation11] sm:$0xff]
    %v212 = vld [vmem:[#allocation11 + $0x8] sm:$0xff]
    %v213 = vld [vmem:[#allocation11 + $0x10] sm:$0xff]
    %v214 = vld [vmem:[#allocation11 + $0x18] sm:$0xff]
    %v215 = vld [vmem:[#allocation11 + $0x20] sm:$0xff]
    %v216 = vld [vmem:[#allocation11 + $0x28] sm:$0xff]
    %v217 = vld [vmem:[#allocation11 + $0x30] sm:$0xff]
    %v218 = vld [vmem:[#allocation11 + $0x38] sm:$0xff]
    %219 = vst [vmem:[#allocation15] sm:$0xff] %v211
    %220 = vst [vmem:[#allocation15 + $0x8] sm:$0xff] %v212
    %221 = vst [vmem:[#allocation15 + $0x10] sm:$0xff] %v213
    %222 = vst [vmem:[#allocation15 + $0x18] sm:$0xff] %v214
    %223 = vst [vmem:[#allocation15 + $0x20] sm:$0xff] %v215
    %224 = vst [vmem:[#allocation15 + $0x28] sm:$0xff] %v216
    %225 = vst [vmem:[#allocation15 + $0x30] sm:$0xff] %v217
    %226 = vst [vmem:[#allocation15 + $0x38] sm:$0xff] %v218
    %v227 = vld [vmem:[#allocation12] sm:$0xff]
    %v228 = vld [vmem:[#allocation12 + $0x8] sm:$0xff]
    %v229 = vld [vmem:[#allocation12 + $0x10] sm:$0xff]
    %v230 = vld [vmem:[#allocation12 + $0x18] sm:$0xff]
    %v231 = vld [vmem:[#allocation12 + $0x20] sm:$0xff]
    %v232 = vld [vmem:[#allocation12 + $0x28] sm:$0xff]
    %v233 = vld [vmem:[#allocation12 + $0x30] sm:$0xff]
    %v234 = vld [vmem:[#allocation12 + $0x38] sm:$0xff]
    loop: start=0, step=1, limit=4
    $region58: #{tpu_custom_call.1} parent=1 // loop_pre_header
      _
    $region59: #{tpu_custom_call.1} parent=1 // loop_header
      %s236 = sphi 0, %s240
      %p237 = scmp.ge.s32.totalorder %s236, 4
    $region60: #{tpu_custom_call.1} parent=1 // loop_header_branch
      %239 = sbr.rel (%p237) target = $region64
    $region61: #{tpu_custom_call.1} parent=1 // loop_body
      %v241 = vld [vmem:[#allocation15] sm:$0xff]
      %v242 = vld [vmem:[#allocation15 + $0x8] sm:$0xff]
      %v243 = vld [vmem:[#allocation15 + $0x10] sm:$0xff]
      %v244 = vld [vmem:[#allocation15 + $0x18] sm:$0xff]
      %v245 = vld [vmem:[#allocation15 + $0x20] sm:$0xff]
      %v246 = vld [vmem:[#allocation15 + $0x28] sm:$0xff]
      %v247 = vld [vmem:[#allocation15 + $0x30] sm:$0xff]
      %v248 = vld [vmem:[#allocation15 + $0x38] sm:$0xff]
      %249 = vrot.lane.b32.xlu0 %v241, 126
      %v250 = vpop.permute.xlu0 %249
      %251 = vrot.lane.b32.xlu0 %v242, 126
      %v252 = vpop.permute.xlu0 %251
      %253 = vrot.lane.b32.xlu0 %v243, 126
      %v254 = vpop.permute.xlu0 %253
      %255 = vrot.lane.b32.xlu0 %v244, 126
      %v256 = vpop.permute.xlu0 %255
      %257 = vrot.lane.b32.xlu0 %v245, 126
      %v258 = vpop.permute.xlu0 %257
      %259 = vrot.lane.b32.xlu0 %v246, 126
      %v260 = vpop.permute.xlu0 %259
      %261 = vrot.lane.b32.xlu0 %v247, 126
      %v262 = vpop.permute.xlu0 %261
      %263 = vrot.lane.b32.xlu0 %v248, 126
      %v264 = vpop.permute.xlu0 %263
      %v265 = vstv %s114
      %v266 = vmul.f32 %v265, %v250
      %v267 = vmul.f32 %v265, %v252
      %v268 = vmul.f32 %v265, %v254
      %v269 = vmul.f32 %v265, %v256
      %v270 = vmul.f32 %v265, %v258
      %v271 = vmul.f32 %v265, %v260
      %v272 = vmul.f32 %v265, %v262
      %v273 = vmul.f32 %v265, %v264
      %v274 = vstv %s119
      %v275 = vmul.f32 %v274, %v250
      %v276 = vmul.f32 %v274, %v252
      %v277 = vmul.f32 %v274, %v254
      %v278 = vmul.f32 %v274, %v256
      %v279 = vmul.f32 %v274, %v258
      %v280 = vmul.f32 %v274, %v260
      %v281 = vmul.f32 %v274, %v262
      %v282 = vmul.f32 %v274, %v264
      %v283 = vstv %s124
      %v284 = vmul.f32 %v283, %v250
      %v285 = vmul.f32 %v283, %v252
      %v286 = vmul.f32 %v283, %v254
      %v287 = vmul.f32 %v283, %v256
      %v288 = vmul.f32 %v283, %v258
      %v289 = vmul.f32 %v283, %v260
      %v290 = vmul.f32 %v283, %v262
      %v291 = vmul.f32 %v283, %v264
      %v292 = vstv %s129
      %v293 = vmul.f32 %v292, %v250
      %v294 = vmul.f32 %v292, %v252
      %v295 = vmul.f32 %v292, %v254
      %v296 = vmul.f32 %v292, %v256
      %v297 = vmul.f32 %v292, %v258
      %v298 = vmul.f32 %v292, %v260
      %v299 = vmul.f32 %v292, %v262
      %v300 = vmul.f32 %v292, %v264
      %v301 = vstv %s134
      %v302 = vmul.f32 %v301, %v250
      %v303 = vmul.f32 %v301, %v252
      %v304 = vmul.f32 %v301, %v254
      %v305 = vmul.f32 %v301, %v256
      %v306 = vmul.f32 %v301, %v258
      %v307 = vmul.f32 %v301, %v260
      %v308 = vmul.f32 %v301, %v262
      %v309 = vmul.f32 %v301, %v264
      %310 = vrot.lane.b32.xlu0 %v241, 127
      %v311 = vpop.permute.xlu0 %310
      %312 = vrot.lane.b32.xlu0 %v242, 127
      %v313 = vpop.permute.xlu0 %312
      %314 = vrot.lane.b32.xlu0 %v243, 127
      %v315 = vpop.permute.xlu0 %314
      %316 = vrot.lane.b32.xlu0 %v244, 127
      %v317 = vpop.permute.xlu0 %316
      %318 = vrot.lane.b32.xlu0 %v245, 127
      %v319 = vpop.permute.xlu0 %318
      %320 = vrot.lane.b32.xlu0 %v246, 127
      %v321 = vpop.permute.xlu0 %320
      %322 = vrot.lane.b32.xlu0 %v247, 127
      %v323 = vpop.permute.xlu0 %322
      %324 = vrot.lane.b32.xlu0 %v248, 127
      %v325 = vpop.permute.xlu0 %324
      %v326 = vstv %s115
      %v327 = vmul.f32 %v326, %v311
      %v328 = vmul.f32 %v326, %v313
      %v329 = vmul.f32 %v326, %v315
      %v330 = vmul.f32 %v326, %v317
      %v331 = vmul.f32 %v326, %v319
      %v332 = vmul.f32 %v326, %v321
      %v333 = vmul.f32 %v326, %v323
      %v334 = vmul.f32 %v326, %v325
      %v335 = vadd.f32 %v266, %v327
      %v336 = vadd.f32 %v267, %v328
      %v337 = vadd.f32 %v268, %v329
      %v338 = vadd.f32 %v269, %v330
      %v339 = vadd.f32 %v270, %v331
      %v340 = vadd.f32 %v271, %v332
      %v341 = vadd.f32 %v272, %v333
      %v342 = vadd.f32 %v273, %v334
      %v343 = vstv %s120
      %v344 = vmul.f32 %v343, %v311
      %v345 = vmul.f32 %v343, %v313
      %v346 = vmul.f32 %v343, %v315
      %v347 = vmul.f32 %v343, %v317
      %v348 = vmul.f32 %v343, %v319
      %v349 = vmul.f32 %v343, %v321
      %v350 = vmul.f32 %v343, %v323
      %v351 = vmul.f32 %v343, %v325
      %v352 = vadd.f32 %v275, %v344
      %v353 = vadd.f32 %v276, %v345
      %v354 = vadd.f32 %v277, %v346
      %v355 = vadd.f32 %v278, %v347
      %v356 = vadd.f32 %v279, %v348
      %v357 = vadd.f32 %v280, %v349
      %v358 = vadd.f32 %v281, %v350
      %v359 = vadd.f32 %v282, %v351
      %v360 = vstv %s125
      %v361 = vmul.f32 %v360, %v311
      %v362 = vmul.f32 %v360, %v313
      %v363 = vmul.f32 %v360, %v315
      %v364 = vmul.f32 %v360, %v317
      %v365 = vmul.f32 %v360, %v319
      %v366 = vmul.f32 %v360, %v321
      %v367 = vmul.f32 %v360, %v323
      %v368 = vmul.f32 %v360, %v325
      %v369 = vadd.f32 %v284, %v361
      %v370 = vadd.f32 %v285, %v362
      %v371 = vadd.f32 %v286, %v363
      %v372 = vadd.f32 %v287, %v364
      %v373 = vadd.f32 %v288, %v365
      %v374 = vadd.f32 %v289, %v366
      %v375 = vadd.f32 %v290, %v367
      %v376 = vadd.f32 %v291, %v368
      %v377 = vstv %s130
      %v378 = vmul.f32 %v377, %v311
      %v379 = vmul.f32 %v377, %v313
      %v380 = vmul.f32 %v377, %v315
      %v381 = vmul.f32 %v377, %v317
      %v382 = vmul.f32 %v377, %v319
      %v383 = vmul.f32 %v377, %v321
      %v384 = vmul.f32 %v377, %v323
      %v385 = vmul.f32 %v377, %v325
      %v386 = vadd.f32 %v293, %v378
      %v387 = vadd.f32 %v294, %v379
      %v388 = vadd.f32 %v295, %v380
      %v389 = vadd.f32 %v296, %v381
      %v390 = vadd.f32 %v297, %v382
      %v391 = vadd.f32 %v298, %v383
      %v392 = vadd.f32 %v299, %v384
      %v393 = vadd.f32 %v300, %v385
      %v394 = vstv %s135
      %v395 = vmul.f32 %v394, %v311
      %v396 = vmul.f32 %v394, %v313
      %v397 = vmul.f32 %v394, %v315
      %v398 = vmul.f32 %v394, %v317
      %v399 = vmul.f32 %v394, %v319
      %v400 = vmul.f32 %v394, %v321
      %v401 = vmul.f32 %v394, %v323
      %v402 = vmul.f32 %v394, %v325
      %v403 = vadd.f32 %v302, %v395
      %v404 = vadd.f32 %v303, %v396
      %v405 = vadd.f32 %v304, %v397
      %v406 = vadd.f32 %v305, %v398
      %v407 = vadd.f32 %v306, %v399
      %v408 = vadd.f32 %v307, %v400
      %v409 = vadd.f32 %v308, %v401
      %v410 = vadd.f32 %v309, %v402
      %v411 = vstv %s116
      %v412 = vmul.f32 %v411, %v241
      %v413 = vmul.f32 %v411, %v242
      %v414 = vmul.f32 %v411, %v243
      %v415 = vmul.f32 %v411, %v244
      %v416 = vmul.f32 %v411, %v245
      %v417 = vmul.f32 %v411, %v246
      %v418 = vmul.f32 %v411, %v247
      %v419 = vmul.f32 %v411, %v248
      %v420 = vadd.f32 %v335, %v412
      %v421 = vadd.f32 %v336, %v413
      %v422 = vadd.f32 %v337, %v414
      %v423 = vadd.f32 %v338, %v415
      %v424 = vadd.f32 %v339, %v416
      %v425 = vadd.f32 %v340, %v417
      %v426 = vadd.f32 %v341, %v418
      %v427 = vadd.f32 %v342, %v419
      %v428 = vstv %s121
      %v429 = vmul.f32 %v428, %v241
      %v430 = vmul.f32 %v428, %v242
      %v431 = vmul.f32 %v428, %v243
      %v432 = vmul.f32 %v428, %v244
      %v433 = vmul.f32 %v428, %v245
      %v434 = vmul.f32 %v428, %v246
      %v435 = vmul.f32 %v428, %v247
      %v436 = vmul.f32 %v428, %v248
      %v437 = vadd.f32 %v352, %v429
      %v438 = vadd.f32 %v353, %v430
      %v439 = vadd.f32 %v354, %v431
      %v440 = vadd.f32 %v355, %v432
      %v441 = vadd.f32 %v356, %v433
      %v442 = vadd.f32 %v357, %v434
      %v443 = vadd.f32 %v358, %v435
      %v444 = vadd.f32 %v359, %v436
      %v445 = vstv %s126
      %v446 = vmul.f32 %v445, %v241
      %v447 = vmul.f32 %v445, %v242
      %v448 = vmul.f32 %v445, %v243
      %v449 = vmul.f32 %v445, %v244
      %v450 = vmul.f32 %v445, %v245
      %v451 = vmul.f32 %v445, %v246
      %v452 = vmul.f32 %v445, %v247
      %v453 = vmul.f32 %v445, %v248
      %v454 = vadd.f32 %v369, %v446
      %v455 = vadd.f32 %v370, %v447
      %v456 = vadd.f32 %v371, %v448
      %v457 = vadd.f32 %v372, %v449
      %v458 = vadd.f32 %v373, %v450
      %v459 = vadd.f32 %v374, %v451
      %v460 = vadd.f32 %v375, %v452
      %v461 = vadd.f32 %v376, %v453
      %v462 = vstv %s131
      %v463 = vmul.f32 %v462, %v241
      %v464 = vmul.f32 %v462, %v242
      %v465 = vmul.f32 %v462, %v243
      %v466 = vmul.f32 %v462, %v244
      %v467 = vmul.f32 %v462, %v245
      %v468 = vmul.f32 %v462, %v246
      %v469 = vmul.f32 %v462, %v247
      %v470 = vmul.f32 %v462, %v248
      %v471 = vadd.f32 %v386, %v463
      %v472 = vadd.f32 %v387, %v464
      %v473 = vadd.f32 %v388, %v465
      %v474 = vadd.f32 %v389, %v466
      %v475 = vadd.f32 %v390, %v467
      %v476 = vadd.f32 %v391, %v468
      %v477 = vadd.f32 %v392, %v469
      %v478 = vadd.f32 %v393, %v470
      %v479 = vstv %s136
      %v480 = vmul.f32 %v479, %v241
      %v481 = vmul.f32 %v479, %v242
      %v482 = vmul.f32 %v479, %v243
      %v483 = vmul.f32 %v479, %v244
      %v484 = vmul.f32 %v479, %v245
      %v485 = vmul.f32 %v479, %v246
      %v486 = vmul.f32 %v479, %v247
      %v487 = vmul.f32 %v479, %v248
      %v488 = vadd.f32 %v403, %v480
      %v489 = vadd.f32 %v404, %v481
      %v490 = vadd.f32 %v405, %v482
      %v491 = vadd.f32 %v406, %v483
      %v492 = vadd.f32 %v407, %v484
      %v493 = vadd.f32 %v408, %v485
      %v494 = vadd.f32 %v409, %v486
      %v495 = vadd.f32 %v410, %v487
      %496 = vrot.lane.b32.xlu0 %v241, 1
      %v497 = vpop.permute.xlu0 %496
      %498 = vrot.lane.b32.xlu0 %v242, 1
      %v499 = vpop.permute.xlu0 %498
      %500 = vrot.lane.b32.xlu0 %v243, 1
      %v501 = vpop.permute.xlu0 %500
      %502 = vrot.lane.b32.xlu0 %v244, 1
      %v503 = vpop.permute.xlu0 %502
      %504 = vrot.lane.b32.xlu0 %v245, 1
      %v505 = vpop.permute.xlu0 %504
      %506 = vrot.lane.b32.xlu0 %v246, 1
      %v507 = vpop.permute.xlu0 %506
      %508 = vrot.lane.b32.xlu0 %v247, 1
      %v509 = vpop.permute.xlu0 %508
      %510 = vrot.lane.b32.xlu0 %v248, 1
      %v511 = vpop.permute.xlu0 %510
      %v512 = vstv %s117
      %v513 = vmul.f32 %v512, %v497
      %v514 = vmul.f32 %v512, %v499
      %v515 = vmul.f32 %v512, %v501
      %v516 = vmul.f32 %v512, %v503
      %v517 = vmul.f32 %v512, %v505
      %v518 = vmul.f32 %v512, %v507
      %v519 = vmul.f32 %v512, %v509
      %v520 = vmul.f32 %v512, %v511
      %v521 = vadd.f32 %v420, %v513
      %v522 = vadd.f32 %v421, %v514
      %v523 = vadd.f32 %v422, %v515
      %v524 = vadd.f32 %v423, %v516
      %v525 = vadd.f32 %v424, %v517
      %v526 = vadd.f32 %v425, %v518
      %v527 = vadd.f32 %v426, %v519
      %v528 = vadd.f32 %v427, %v520
      %v529 = vstv %s122
      %v530 = vmul.f32 %v529, %v497
      %v531 = vmul.f32 %v529, %v499
      %v532 = vmul.f32 %v529, %v501
      %v533 = vmul.f32 %v529, %v503
      %v534 = vmul.f32 %v529, %v505
      %v535 = vmul.f32 %v529, %v507
      %v536 = vmul.f32 %v529, %v509
      %v537 = vmul.f32 %v529, %v511
      %v538 = vadd.f32 %v437, %v530
      %v539 = vadd.f32 %v438, %v531
      %v540 = vadd.f32 %v439, %v532
      %v541 = vadd.f32 %v440, %v533
      %v542 = vadd.f32 %v441, %v534
      %v543 = vadd.f32 %v442, %v535
      %v544 = vadd.f32 %v443, %v536
      %v545 = vadd.f32 %v444, %v537
      %v546 = vstv %s127
      %v547 = vmul.f32 %v546, %v497
      %v548 = vmul.f32 %v546, %v499
      %v549 = vmul.f32 %v546, %v501
      %v550 = vmul.f32 %v546, %v503
      %v551 = vmul.f32 %v546, %v505
      %v552 = vmul.f32 %v546, %v507
      %v553 = vmul.f32 %v546, %v509
      %v554 = vmul.f32 %v546, %v511
      %v555 = vadd.f32 %v454, %v547
      %v556 = vadd.f32 %v455, %v548
      %v557 = vadd.f32 %v456, %v549
      %v558 = vadd.f32 %v457, %v550
      %v559 = vadd.f32 %v458, %v551
      %v560 = vadd.f32 %v459, %v552
      %v561 = vadd.f32 %v460, %v553
      %v562 = vadd.f32 %v461, %v554
      %v563 = vstv %s132
      %v564 = vmul.f32 %v563, %v497
      %v565 = vmul.f32 %v563, %v499
      %v566 = vmul.f32 %v563, %v501
      %v567 = vmul.f32 %v563, %v503
      %v568 = vmul.f32 %v563, %v505
      %v569 = vmul.f32 %v563, %v507
      %v570 = vmul.f32 %v563, %v509
      %v571 = vmul.f32 %v563, %v511
      %v572 = vadd.f32 %v471, %v564
      %v573 = vadd.f32 %v472, %v565
      %v574 = vadd.f32 %v473, %v566
      %v575 = vadd.f32 %v474, %v567
      %v576 = vadd.f32 %v475, %v568
      %v577 = vadd.f32 %v476, %v569
      %v578 = vadd.f32 %v477, %v570
      %v579 = vadd.f32 %v478, %v571
      %v580 = vstv %s137
      %v581 = vmul.f32 %v580, %v497
      %v582 = vmul.f32 %v580, %v499
      %v583 = vmul.f32 %v580, %v501
      %v584 = vmul.f32 %v580, %v503
      %v585 = vmul.f32 %v580, %v505
      %v586 = vmul.f32 %v580, %v507
      %v587 = vmul.f32 %v580, %v509
      %v588 = vmul.f32 %v580, %v511
      %v589 = vadd.f32 %v488, %v581
      %v590 = vadd.f32 %v489, %v582
      %v591 = vadd.f32 %v490, %v583
      %v592 = vadd.f32 %v491, %v584
      %v593 = vadd.f32 %v492, %v585
      %v594 = vadd.f32 %v493, %v586
      %v595 = vadd.f32 %v494, %v587
      %v596 = vadd.f32 %v495, %v588
      %597 = vrot.lane.b32.xlu0 %v241, 2
      %v598 = vpop.permute.xlu0 %597
      %599 = vrot.lane.b32.xlu0 %v242, 2
      %v600 = vpop.permute.xlu0 %599
      %601 = vrot.lane.b32.xlu0 %v243, 2
      %v602 = vpop.permute.xlu0 %601
      %603 = vrot.lane.b32.xlu0 %v244, 2
      %v604 = vpop.permute.xlu0 %603
      %605 = vrot.lane.b32.xlu0 %v245, 2
      %v606 = vpop.permute.xlu0 %605
      %607 = vrot.lane.b32.xlu0 %v246, 2
      %v608 = vpop.permute.xlu0 %607
      %609 = vrot.lane.b32.xlu0 %v247, 2
      %v610 = vpop.permute.xlu0 %609
      %611 = vrot.lane.b32.xlu0 %v248, 2
      %v612 = vpop.permute.xlu0 %611
      %v613 = vstv %s118
      %v614 = vmul.f32 %v613, %v598
      %v615 = vmul.f32 %v613, %v600
      %v616 = vmul.f32 %v613, %v602
      %v617 = vmul.f32 %v613, %v604
      %v618 = vmul.f32 %v613, %v606
      %v619 = vmul.f32 %v613, %v608
      %v620 = vmul.f32 %v613, %v610
      %v621 = vmul.f32 %v613, %v612
      %v622 = vadd.f32 %v521, %v614
      %v623 = vadd.f32 %v522, %v615
      %v624 = vadd.f32 %v523, %v616
      %v625 = vadd.f32 %v524, %v617
      %v626 = vadd.f32 %v525, %v618
      %v627 = vadd.f32 %v526, %v619
      %v628 = vadd.f32 %v527, %v620
      %v629 = vadd.f32 %v528, %v621
      %v630 = vstv %s123
      %v631 = vmul.f32 %v630, %v598
      %v632 = vmul.f32 %v630, %v600
      %v633 = vmul.f32 %v630, %v602
      %v634 = vmul.f32 %v630, %v604
      %v635 = vmul.f32 %v630, %v606
      %v636 = vmul.f32 %v630, %v608
      %v637 = vmul.f32 %v630, %v610
      %v638 = vmul.f32 %v630, %v612
      %v639 = vadd.f32 %v538, %v631
      %v640 = vadd.f32 %v539, %v632
      %v641 = vadd.f32 %v540, %v633
      %v642 = vadd.f32 %v541, %v634
      %v643 = vadd.f32 %v542, %v635
      %v644 = vadd.f32 %v543, %v636
      %v645 = vadd.f32 %v544, %v637
      %v646 = vadd.f32 %v545, %v638
      %v647 = vstv %s128
      %v648 = vmul.f32 %v647, %v598
      %v649 = vmul.f32 %v647, %v600
      %v650 = vmul.f32 %v647, %v602
      %v651 = vmul.f32 %v647, %v604
      %v652 = vmul.f32 %v647, %v606
      %v653 = vmul.f32 %v647, %v608
      %v654 = vmul.f32 %v647, %v610
      %v655 = vmul.f32 %v647, %v612
      %v656 = vadd.f32 %v555, %v648
      %v657 = vadd.f32 %v556, %v649
      %v658 = vadd.f32 %v557, %v650
      %v659 = vadd.f32 %v558, %v651
      %v660 = vadd.f32 %v559, %v652
      %v661 = vadd.f32 %v560, %v653
      %v662 = vadd.f32 %v561, %v654
      %v663 = vadd.f32 %v562, %v655
      %v664 = vstv %s133
      %v665 = vmul.f32 %v664, %v598
      %v666 = vmul.f32 %v664, %v600
      %v667 = vmul.f32 %v664, %v602
      %v668 = vmul.f32 %v664, %v604
      %v669 = vmul.f32 %v664, %v606
      %v670 = vmul.f32 %v664, %v608
      %v671 = vmul.f32 %v664, %v610
      %v672 = vmul.f32 %v664, %v612
      %v673 = vadd.f32 %v572, %v665
      %v674 = vadd.f32 %v573, %v666
      %v675 = vadd.f32 %v574, %v667
      %v676 = vadd.f32 %v575, %v668
      %v677 = vadd.f32 %v576, %v669
      %v678 = vadd.f32 %v577, %v670
      %v679 = vadd.f32 %v578, %v671
      %v680 = vadd.f32 %v579, %v672
      %v681 = vstv %s138
      %v682 = vmul.f32 %v681, %v598
      %v683 = vmul.f32 %v681, %v600
      %v684 = vmul.f32 %v681, %v602
      %v685 = vmul.f32 %v681, %v604
      %v686 = vmul.f32 %v681, %v606
      %v687 = vmul.f32 %v681, %v608
      %v688 = vmul.f32 %v681, %v610
      %v689 = vmul.f32 %v681, %v612
      %v690 = vadd.f32 %v589, %v682
      %v691 = vadd.f32 %v590, %v683
      %v692 = vadd.f32 %v591, %v684
      %v693 = vadd.f32 %v592, %v685
      %v694 = vadd.f32 %v593, %v686
      %v695 = vadd.f32 %v594, %v687
      %v696 = vadd.f32 %v595, %v688
      %v697 = vadd.f32 %v596, %v689
      %v698 = vrot.slane %v622, 2
      %v699 = vrot.slane %v623, 2
      %v700 = vrot.slane %v624, 2
      %v701 = vrot.slane %v625, 2
      %v702 = vrot.slane %v626, 2
      %v703 = vrot.slane %v627, 2
      %v704 = vrot.slane %v628, 2
      %v705 = vrot.slane %v629, 2
      %vm706 = vcmp.lt.s32.totalorder %v183, 6
      %v707 = vsel %vm706, %v704, %v705
      %v708 = vsel %vm706, %v703, %v704
      %v709 = vsel %vm706, %v702, %v703
      %v710 = vsel %vm706, %v701, %v702
      %v711 = vsel %vm706, %v700, %v701
      %v712 = vsel %vm706, %v699, %v700
      %v713 = vsel %vm706, %v698, %v699
      %v714 = vsel %vm706, %v705, %v698
      %v715 = vrot.slane %v639, 1
      %v716 = vrot.slane %v640, 1
      %v717 = vrot.slane %v641, 1
      %v718 = vrot.slane %v642, 1
      %v719 = vrot.slane %v643, 1
      %v720 = vrot.slane %v644, 1
      %v721 = vrot.slane %v645, 1
      %v722 = vrot.slane %v646, 1
      %vm723 = vcmp.lt.s32.totalorder %v183, 7
      %v724 = vsel %vm723, %v721, %v722
      %v725 = vsel %vm723, %v720, %v721
      %v726 = vsel %vm723, %v719, %v720
      %v727 = vsel %vm723, %v718, %v719
      %v728 = vsel %vm723, %v717, %v718
      %v729 = vsel %vm723, %v716, %v717
      %v730 = vsel %vm723, %v715, %v716
      %v731 = vsel %vm723, %v722, %v715
      %v732 = vadd.f32 %v713, %v730
      %v733 = vadd.f32 %v712, %v729
      %v734 = vadd.f32 %v711, %v728
      %v735 = vadd.f32 %v710, %v727
      %v736 = vadd.f32 %v709, %v726
      %v737 = vadd.f32 %v708, %v725
      %v738 = vadd.f32 %v707, %v724
      %v739 = vadd.f32 %v714, %v731
      %v740 = vadd.f32 %v732, %v656
      %v741 = vadd.f32 %v733, %v657
      %v742 = vadd.f32 %v734, %v658
      %v743 = vadd.f32 %v735, %v659
      %v744 = vadd.f32 %v736, %v660
      %v745 = vadd.f32 %v737, %v661
      %v746 = vadd.f32 %v738, %v662
      %v747 = vadd.f32 %v739, %v663
      %v748 = vrot.slane %v673, 7
      %v749 = vrot.slane %v674, 7
      %v750 = vrot.slane %v675, 7
      %v751 = vrot.slane %v676, 7
      %v752 = vrot.slane %v677, 7
      %v753 = vrot.slane %v678, 7
      %v754 = vrot.slane %v679, 7
      %v755 = vrot.slane %v680, 7
      %vm756 = vcmp.lt.s32.totalorder %v183, 1
      %v757 = vsel %vm756, %v754, %v755
      %v758 = vsel %vm756, %v753, %v754
      %v759 = vsel %vm756, %v752, %v753
      %v760 = vsel %vm756, %v751, %v752
      %v761 = vsel %vm756, %v750, %v751
      %v762 = vsel %vm756, %v749, %v750
      %v763 = vsel %vm756, %v748, %v749
      %v764 = vsel %vm756, %v755, %v748
      %v765 = vadd.f32 %v740, %v764
      %v766 = vadd.f32 %v741, %v763
      %v767 = vadd.f32 %v742, %v762
      %v768 = vadd.f32 %v743, %v761
      %v769 = vadd.f32 %v744, %v760
      %v770 = vadd.f32 %v745, %v759
      %v771 = vadd.f32 %v746, %v758
      %v772 = vadd.f32 %v747, %v757
      %v773 = vrot.slane %v690, 6
      %v774 = vrot.slane %v691, 6
      %v775 = vrot.slane %v692, 6
      %v776 = vrot.slane %v693, 6
      %v777 = vrot.slane %v694, 6
      %v778 = vrot.slane %v695, 6
      %v779 = vrot.slane %v696, 6
      %v780 = vrot.slane %v697, 6
      %vm781 = vcmp.lt.s32.totalorder %v183, 2
      %v782 = vsel %vm781, %v779, %v780
      %v783 = vsel %vm781, %v778, %v779
      %v784 = vsel %vm781, %v777, %v778
      %v785 = vsel %vm781, %v776, %v777
      %v786 = vsel %vm781, %v775, %v776
      %v787 = vsel %vm781, %v774, %v775
      %v788 = vsel %vm781, %v773, %v774
      %v789 = vsel %vm781, %v780, %v773
      %v790 = vadd.f32 %v765, %v789
      %v791 = vadd.f32 %v766, %v788
      %v792 = vadd.f32 %v767, %v787
      %v793 = vadd.f32 %v768, %v786
      %v794 = vadd.f32 %v769, %v785
      %v795 = vadd.f32 %v770, %v784
      %v796 = vadd.f32 %v771, %v783
      %v797 = vadd.f32 %v772, %v782
      %798 = vrot.lane.b32.xlu0 %v790, 2
      %v799 = vpop.permute.xlu0 %798
      %800 = vrot.lane.b32.xlu0 %v791, 2
      %v801 = vpop.permute.xlu0 %800
      %802 = vrot.lane.b32.xlu0 %v792, 2
      %v803 = vpop.permute.xlu0 %802
      %804 = vrot.lane.b32.xlu0 %v793, 2
      %v805 = vpop.permute.xlu0 %804
      %806 = vrot.lane.b32.xlu0 %v794, 2
      %v807 = vpop.permute.xlu0 %806
      %808 = vrot.lane.b32.xlu0 %v795, 2
      %v809 = vpop.permute.xlu0 %808
      %810 = vrot.lane.b32.xlu0 %v796, 2
      %v811 = vpop.permute.xlu0 %810
      %812 = vrot.lane.b32.xlu0 %v797, 2
      %v813 = vpop.permute.xlu0 %812
      %v814 = vstv %s139
      %v815 = vmul.f32 %v814, %v799
      %v816 = vmul.f32 %v814, %v801
      %v817 = vmul.f32 %v814, %v803
      %v818 = vmul.f32 %v814, %v805
      %v819 = vmul.f32 %v814, %v807
      %v820 = vmul.f32 %v814, %v809
      %v821 = vmul.f32 %v814, %v811
      %v822 = vmul.f32 %v814, %v813
      %v823 = vstv %s144
      %v824 = vmul.f32 %v823, %v799
      %v825 = vmul.f32 %v823, %v801
      %v826 = vmul.f32 %v823, %v803
      %v827 = vmul.f32 %v823, %v805
      %v828 = vmul.f32 %v823, %v807
      %v829 = vmul.f32 %v823, %v809
      %v830 = vmul.f32 %v823, %v811
      %v831 = vmul.f32 %v823, %v813
      %v832 = vstv %s149
      %v833 = vmul.f32 %v832, %v799
      %v834 = vmul.f32 %v832, %v801
      %v835 = vmul.f32 %v832, %v803
      %v836 = vmul.f32 %v832, %v805
      %v837 = vmul.f32 %v832, %v807
      %v838 = vmul.f32 %v832, %v809
      %v839 = vmul.f32 %v832, %v811
      %v840 = vmul.f32 %v832, %v813
      %v841 = vstv %s154
      %v842 = vmul.f32 %v841, %v799
      %v843 = vmul.f32 %v841, %v801
      %v844 = vmul.f32 %v841, %v803
      %v845 = vmul.f32 %v841, %v805
      %v846 = vmul.f32 %v841, %v807
      %v847 = vmul.f32 %v841, %v809
      %v848 = vmul.f32 %v841, %v811
      %v849 = vmul.f32 %v841, %v813
      %v850 = vstv %s159
      %v851 = vmul.f32 %v850, %v799
      %v852 = vmul.f32 %v850, %v801
      %v853 = vmul.f32 %v850, %v803
      %v854 = vmul.f32 %v850, %v805
      %v855 = vmul.f32 %v850, %v807
      %v856 = vmul.f32 %v850, %v809
      %v857 = vmul.f32 %v850, %v811
      %v858 = vmul.f32 %v850, %v813
      %859 = vrot.lane.b32.xlu0 %v790, 1
      %v860 = vpop.permute.xlu0 %859
      %861 = vrot.lane.b32.xlu0 %v791, 1
      %v862 = vpop.permute.xlu0 %861
      %863 = vrot.lane.b32.xlu0 %v792, 1
      %v864 = vpop.permute.xlu0 %863
      %865 = vrot.lane.b32.xlu0 %v793, 1
      %v866 = vpop.permute.xlu0 %865
      %867 = vrot.lane.b32.xlu0 %v794, 1
      %v868 = vpop.permute.xlu0 %867
      %869 = vrot.lane.b32.xlu0 %v795, 1
      %v870 = vpop.permute.xlu0 %869
      %871 = vrot.lane.b32.xlu0 %v796, 1
      %v872 = vpop.permute.xlu0 %871
      %873 = vrot.lane.b32.xlu0 %v797, 1
      %v874 = vpop.permute.xlu0 %873
      %v875 = vstv %s140
      %v876 = vmul.f32 %v875, %v860
      %v877 = vmul.f32 %v875, %v862
      %v878 = vmul.f32 %v875, %v864
      %v879 = vmul.f32 %v875, %v866
      %v880 = vmul.f32 %v875, %v868
      %v881 = vmul.f32 %v875, %v870
      %v882 = vmul.f32 %v875, %v872
      %v883 = vmul.f32 %v875, %v874
      %v884 = vadd.f32 %v815, %v876
      %v885 = vadd.f32 %v816, %v877
      %v886 = vadd.f32 %v817, %v878
      %v887 = vadd.f32 %v818, %v879
      %v888 = vadd.f32 %v819, %v880
      %v889 = vadd.f32 %v820, %v881
      %v890 = vadd.f32 %v821, %v882
      %v891 = vadd.f32 %v822, %v883
      %v892 = vstv %s145
      %v893 = vmul.f32 %v892, %v860
      %v894 = vmul.f32 %v892, %v862
      %v895 = vmul.f32 %v892, %v864
      %v896 = vmul.f32 %v892, %v866
      %v897 = vmul.f32 %v892, %v868
      %v898 = vmul.f32 %v892, %v870
      %v899 = vmul.f32 %v892, %v872
      %v900 = vmul.f32 %v892, %v874
      %v901 = vadd.f32 %v824, %v893
      %v902 = vadd.f32 %v825, %v894
      %v903 = vadd.f32 %v826, %v895
      %v904 = vadd.f32 %v827, %v896
      %v905 = vadd.f32 %v828, %v897
      %v906 = vadd.f32 %v829, %v898
      %v907 = vadd.f32 %v830, %v899
      %v908 = vadd.f32 %v831, %v900
      %v909 = vstv %s150
      %v910 = vmul.f32 %v909, %v860
      %v911 = vmul.f32 %v909, %v862
      %v912 = vmul.f32 %v909, %v864
      %v913 = vmul.f32 %v909, %v866
      %v914 = vmul.f32 %v909, %v868
      %v915 = vmul.f32 %v909, %v870
      %v916 = vmul.f32 %v909, %v872
      %v917 = vmul.f32 %v909, %v874
      %v918 = vadd.f32 %v833, %v910
      %v919 = vadd.f32 %v834, %v911
      %v920 = vadd.f32 %v835, %v912
      %v921 = vadd.f32 %v836, %v913
      %v922 = vadd.f32 %v837, %v914
      %v923 = vadd.f32 %v838, %v915
      %v924 = vadd.f32 %v839, %v916
      %v925 = vadd.f32 %v840, %v917
      %v926 = vstv %s155
      %v927 = vmul.f32 %v926, %v860
      %v928 = vmul.f32 %v926, %v862
      %v929 = vmul.f32 %v926, %v864
      %v930 = vmul.f32 %v926, %v866
      %v931 = vmul.f32 %v926, %v868
      %v932 = vmul.f32 %v926, %v870
      %v933 = vmul.f32 %v926, %v872
      %v934 = vmul.f32 %v926, %v874
      %v935 = vadd.f32 %v842, %v927
      %v936 = vadd.f32 %v843, %v928
      %v937 = vadd.f32 %v844, %v929
      %v938 = vadd.f32 %v845, %v930
      %v939 = vadd.f32 %v846, %v931
      %v940 = vadd.f32 %v847, %v932
      %v941 = vadd.f32 %v848, %v933
      %v942 = vadd.f32 %v849, %v934
      %v943 = vstv %s160
      %v944 = vmul.f32 %v943, %v860
      %v945 = vmul.f32 %v943, %v862
      %v946 = vmul.f32 %v943, %v864
      %v947 = vmul.f32 %v943, %v866
      %v948 = vmul.f32 %v943, %v868
      %v949 = vmul.f32 %v943, %v870
      %v950 = vmul.f32 %v943, %v872
      %v951 = vmul.f32 %v943, %v874
      %v952 = vadd.f32 %v851, %v944
      %v953 = vadd.f32 %v852, %v945
      %v954 = vadd.f32 %v853, %v946
      %v955 = vadd.f32 %v854, %v947
      %v956 = vadd.f32 %v855, %v948
      %v957 = vadd.f32 %v856, %v949
      %v958 = vadd.f32 %v857, %v950
      %v959 = vadd.f32 %v858, %v951
      %v960 = vstv %s141
      %v961 = vmul.f32 %v960, %v790
      %v962 = vmul.f32 %v960, %v791
      %v963 = vmul.f32 %v960, %v792
      %v964 = vmul.f32 %v960, %v793
      %v965 = vmul.f32 %v960, %v794
      %v966 = vmul.f32 %v960, %v795
      %v967 = vmul.f32 %v960, %v796
      %v968 = vmul.f32 %v960, %v797
      %v969 = vadd.f32 %v884, %v961
      %v970 = vadd.f32 %v885, %v962
      %v971 = vadd.f32 %v886, %v963
      %v972 = vadd.f32 %v887, %v964
      %v973 = vadd.f32 %v888, %v965
      %v974 = vadd.f32 %v889, %v966
      %v975 = vadd.f32 %v890, %v967
      %v976 = vadd.f32 %v891, %v968
      %v977 = vstv %s146
      %v978 = vmul.f32 %v977, %v790
      %v979 = vmul.f32 %v977, %v791
      %v980 = vmul.f32 %v977, %v792
      %v981 = vmul.f32 %v977, %v793
      %v982 = vmul.f32 %v977, %v794
      %v983 = vmul.f32 %v977, %v795
      %v984 = vmul.f32 %v977, %v796
      %v985 = vmul.f32 %v977, %v797
      %v986 = vadd.f32 %v901, %v978
      %v987 = vadd.f32 %v902, %v979
      %v988 = vadd.f32 %v903, %v980
      %v989 = vadd.f32 %v904, %v981
      %v990 = vadd.f32 %v905, %v982
      %v991 = vadd.f32 %v906, %v983
      %v992 = vadd.f32 %v907, %v984
      %v993 = vadd.f32 %v908, %v985
      %v994 = vstv %s151
      %v995 = vmul.f32 %v994, %v790
      %v996 = vmul.f32 %v994, %v791
      %v997 = vmul.f32 %v994, %v792
      %v998 = vmul.f32 %v994, %v793
      %v999 = vmul.f32 %v994, %v794
      %v1000 = vmul.f32 %v994, %v795
      %v1001 = vmul.f32 %v994, %v796
      %v1002 = vmul.f32 %v994, %v797
      %v1003 = vadd.f32 %v918, %v995
      %v1004 = vadd.f32 %v919, %v996
      %v1005 = vadd.f32 %v920, %v997
      %v1006 = vadd.f32 %v921, %v998
      %v1007 = vadd.f32 %v922, %v999
      %v1008 = vadd.f32 %v923, %v1000
      %v1009 = vadd.f32 %v924, %v1001
      %v1010 = vadd.f32 %v925, %v1002
      %v1011 = vstv %s156
      %v1012 = vmul.f32 %v1011, %v790
      %v1013 = vmul.f32 %v1011, %v791
      %v1014 = vmul.f32 %v1011, %v792
      %v1015 = vmul.f32 %v1011, %v793
      %v1016 = vmul.f32 %v1011, %v794
      %v1017 = vmul.f32 %v1011, %v795
      %v1018 = vmul.f32 %v1011, %v796
      %v1019 = vmul.f32 %v1011, %v797
      %v1020 = vadd.f32 %v935, %v1012
      %v1021 = vadd.f32 %v936, %v1013
      %v1022 = vadd.f32 %v937, %v1014
      %v1023 = vadd.f32 %v938, %v1015
      %v1024 = vadd.f32 %v939, %v1016
      %v1025 = vadd.f32 %v940, %v1017
      %v1026 = vadd.f32 %v941, %v1018
      %v1027 = vadd.f32 %v942, %v1019
      %v1028 = vstv %s161
      %v1029 = vmul.f32 %v1028, %v790
      %v1030 = vmul.f32 %v1028, %v791
      %v1031 = vmul.f32 %v1028, %v792
      %v1032 = vmul.f32 %v1028, %v793
      %v1033 = vmul.f32 %v1028, %v794
      %v1034 = vmul.f32 %v1028, %v795
      %v1035 = vmul.f32 %v1028, %v796
      %v1036 = vmul.f32 %v1028, %v797
      %v1037 = vadd.f32 %v952, %v1029
      %v1038 = vadd.f32 %v953, %v1030
      %v1039 = vadd.f32 %v954, %v1031
      %v1040 = vadd.f32 %v955, %v1032
      %v1041 = vadd.f32 %v956, %v1033
      %v1042 = vadd.f32 %v957, %v1034
      %v1043 = vadd.f32 %v958, %v1035
      %v1044 = vadd.f32 %v959, %v1036
      %1045 = vrot.lane.b32.xlu0 %v790, 127
      %v1046 = vpop.permute.xlu0 %1045
      %1047 = vrot.lane.b32.xlu0 %v791, 127
      %v1048 = vpop.permute.xlu0 %1047
      %1049 = vrot.lane.b32.xlu0 %v792, 127
      %v1050 = vpop.permute.xlu0 %1049
      %1051 = vrot.lane.b32.xlu0 %v793, 127
      %v1052 = vpop.permute.xlu0 %1051
      %1053 = vrot.lane.b32.xlu0 %v794, 127
      %v1054 = vpop.permute.xlu0 %1053
      %1055 = vrot.lane.b32.xlu0 %v795, 127
      %v1056 = vpop.permute.xlu0 %1055
      %1057 = vrot.lane.b32.xlu0 %v796, 127
      %v1058 = vpop.permute.xlu0 %1057
      %1059 = vrot.lane.b32.xlu0 %v797, 127
      %v1060 = vpop.permute.xlu0 %1059
      %v1061 = vstv %s142
      %v1062 = vmul.f32 %v1061, %v1046
      %v1063 = vmul.f32 %v1061, %v1048
      %v1064 = vmul.f32 %v1061, %v1050
      %v1065 = vmul.f32 %v1061, %v1052
      %v1066 = vmul.f32 %v1061, %v1054
      %v1067 = vmul.f32 %v1061, %v1056
      %v1068 = vmul.f32 %v1061, %v1058
      %v1069 = vmul.f32 %v1061, %v1060
      %v1070 = vadd.f32 %v969, %v1062
      %v1071 = vadd.f32 %v970, %v1063
      %v1072 = vadd.f32 %v971, %v1064
      %v1073 = vadd.f32 %v972, %v1065
      %v1074 = vadd.f32 %v973, %v1066
      %v1075 = vadd.f32 %v974, %v1067
      %v1076 = vadd.f32 %v975, %v1068
      %v1077 = vadd.f32 %v976, %v1069
      %v1078 = vstv %s147
      %v1079 = vmul.f32 %v1078, %v1046
      %v1080 = vmul.f32 %v1078, %v1048
      %v1081 = vmul.f32 %v1078, %v1050
      %v1082 = vmul.f32 %v1078, %v1052
      %v1083 = vmul.f32 %v1078, %v1054
      %v1084 = vmul.f32 %v1078, %v1056
      %v1085 = vmul.f32 %v1078, %v1058
      %v1086 = vmul.f32 %v1078, %v1060
      %v1087 = vadd.f32 %v986, %v1079
      %v1088 = vadd.f32 %v987, %v1080
      %v1089 = vadd.f32 %v988, %v1081
      %v1090 = vadd.f32 %v989, %v1082
      %v1091 = vadd.f32 %v990, %v1083
      %v1092 = vadd.f32 %v991, %v1084
      %v1093 = vadd.f32 %v992, %v1085
      %v1094 = vadd.f32 %v993, %v1086
      %v1095 = vstv %s152
      %v1096 = vmul.f32 %v1095, %v1046
      %v1097 = vmul.f32 %v1095, %v1048
      %v1098 = vmul.f32 %v1095, %v1050
      %v1099 = vmul.f32 %v1095, %v1052
      %v1100 = vmul.f32 %v1095, %v1054
      %v1101 = vmul.f32 %v1095, %v1056
      %v1102 = vmul.f32 %v1095, %v1058
      %v1103 = vmul.f32 %v1095, %v1060
      %v1104 = vadd.f32 %v1003, %v1096
      %v1105 = vadd.f32 %v1004, %v1097
      %v1106 = vadd.f32 %v1005, %v1098
      %v1107 = vadd.f32 %v1006, %v1099
      %v1108 = vadd.f32 %v1007, %v1100
      %v1109 = vadd.f32 %v1008, %v1101
      %v1110 = vadd.f32 %v1009, %v1102
      %v1111 = vadd.f32 %v1010, %v1103
      %v1112 = vstv %s157
      %v1113 = vmul.f32 %v1112, %v1046
      %v1114 = vmul.f32 %v1112, %v1048
      %v1115 = vmul.f32 %v1112, %v1050
      %v1116 = vmul.f32 %v1112, %v1052
      %v1117 = vmul.f32 %v1112, %v1054
      %v1118 = vmul.f32 %v1112, %v1056
      %v1119 = vmul.f32 %v1112, %v1058
      %v1120 = vmul.f32 %v1112, %v1060
      %v1121 = vadd.f32 %v1020, %v1113
      %v1122 = vadd.f32 %v1021, %v1114
      %v1123 = vadd.f32 %v1022, %v1115
      %v1124 = vadd.f32 %v1023, %v1116
      %v1125 = vadd.f32 %v1024, %v1117
      %v1126 = vadd.f32 %v1025, %v1118
      %v1127 = vadd.f32 %v1026, %v1119
      %v1128 = vadd.f32 %v1027, %v1120
      %v1129 = vstv %s162
      %v1130 = vmul.f32 %v1129, %v1046
      %v1131 = vmul.f32 %v1129, %v1048
      %v1132 = vmul.f32 %v1129, %v1050
      %v1133 = vmul.f32 %v1129, %v1052
      %v1134 = vmul.f32 %v1129, %v1054
      %v1135 = vmul.f32 %v1129, %v1056
      %v1136 = vmul.f32 %v1129, %v1058
      %v1137 = vmul.f32 %v1129, %v1060
      %v1138 = vadd.f32 %v1037, %v1130
      %v1139 = vadd.f32 %v1038, %v1131
      %v1140 = vadd.f32 %v1039, %v1132
      %v1141 = vadd.f32 %v1040, %v1133
      %v1142 = vadd.f32 %v1041, %v1134
      %v1143 = vadd.f32 %v1042, %v1135
      %v1144 = vadd.f32 %v1043, %v1136
      %v1145 = vadd.f32 %v1044, %v1137
      %1146 = vrot.lane.b32.xlu0 %v790, 126
      %v1147 = vpop.permute.xlu0 %1146
      %1148 = vrot.lane.b32.xlu0 %v791, 126
      %v1149 = vpop.permute.xlu0 %1148
      %1150 = vrot.lane.b32.xlu0 %v792, 126
      %v1151 = vpop.permute.xlu0 %1150
      %1152 = vrot.lane.b32.xlu0 %v793, 126
      %v1153 = vpop.permute.xlu0 %1152
      %1154 = vrot.lane.b32.xlu0 %v794, 126
      %v1155 = vpop.permute.xlu0 %1154
      %1156 = vrot.lane.b32.xlu0 %v795, 126
      %v1157 = vpop.permute.xlu0 %1156
      %1158 = vrot.lane.b32.xlu0 %v796, 126
      %v1159 = vpop.permute.xlu0 %1158
      %1160 = vrot.lane.b32.xlu0 %v797, 126
      %v1161 = vpop.permute.xlu0 %1160
      %v1162 = vstv %s143
      %v1163 = vmul.f32 %v1162, %v1147
      %v1164 = vmul.f32 %v1162, %v1149
      %v1165 = vmul.f32 %v1162, %v1151
      %v1166 = vmul.f32 %v1162, %v1153
      %v1167 = vmul.f32 %v1162, %v1155
      %v1168 = vmul.f32 %v1162, %v1157
      %v1169 = vmul.f32 %v1162, %v1159
      %v1170 = vmul.f32 %v1162, %v1161
      %v1171 = vadd.f32 %v1070, %v1163
      %v1172 = vadd.f32 %v1071, %v1164
      %v1173 = vadd.f32 %v1072, %v1165
      %v1174 = vadd.f32 %v1073, %v1166
      %v1175 = vadd.f32 %v1074, %v1167
      %v1176 = vadd.f32 %v1075, %v1168
      %v1177 = vadd.f32 %v1076, %v1169
      %v1178 = vadd.f32 %v1077, %v1170
      %v1179 = vstv %s148
      %v1180 = vmul.f32 %v1179, %v1147
      %v1181 = vmul.f32 %v1179, %v1149
      %v1182 = vmul.f32 %v1179, %v1151
      %v1183 = vmul.f32 %v1179, %v1153
      %v1184 = vmul.f32 %v1179, %v1155
      %v1185 = vmul.f32 %v1179, %v1157
      %v1186 = vmul.f32 %v1179, %v1159
      %v1187 = vmul.f32 %v1179, %v1161
      %v1188 = vadd.f32 %v1087, %v1180
      %v1189 = vadd.f32 %v1088, %v1181
      %v1190 = vadd.f32 %v1089, %v1182
      %v1191 = vadd.f32 %v1090, %v1183
      %v1192 = vadd.f32 %v1091, %v1184
      %v1193 = vadd.f32 %v1092, %v1185
      %v1194 = vadd.f32 %v1093, %v1186
      %v1195 = vadd.f32 %v1094, %v1187
      %v1196 = vstv %s153
      %v1197 = vmul.f32 %v1196, %v1147
      %v1198 = vmul.f32 %v1196, %v1149
      %v1199 = vmul.f32 %v1196, %v1151
      %v1200 = vmul.f32 %v1196, %v1153
      %v1201 = vmul.f32 %v1196, %v1155
      %v1202 = vmul.f32 %v1196, %v1157
      %v1203 = vmul.f32 %v1196, %v1159
      %v1204 = vmul.f32 %v1196, %v1161
      %v1205 = vadd.f32 %v1104, %v1197
      %v1206 = vadd.f32 %v1105, %v1198
      %v1207 = vadd.f32 %v1106, %v1199
      %v1208 = vadd.f32 %v1107, %v1200
      %v1209 = vadd.f32 %v1108, %v1201
      %v1210 = vadd.f32 %v1109, %v1202
      %v1211 = vadd.f32 %v1110, %v1203
      %v1212 = vadd.f32 %v1111, %v1204
      %v1213 = vstv %s158
      %v1214 = vmul.f32 %v1213, %v1147
      %v1215 = vmul.f32 %v1213, %v1149
      %v1216 = vmul.f32 %v1213, %v1151
      %v1217 = vmul.f32 %v1213, %v1153
      %v1218 = vmul.f32 %v1213, %v1155
      %v1219 = vmul.f32 %v1213, %v1157
      %v1220 = vmul.f32 %v1213, %v1159
      %v1221 = vmul.f32 %v1213, %v1161
      %v1222 = vadd.f32 %v1121, %v1214
      %v1223 = vadd.f32 %v1122, %v1215
      %v1224 = vadd.f32 %v1123, %v1216
      %v1225 = vadd.f32 %v1124, %v1217
      %v1226 = vadd.f32 %v1125, %v1218
      %v1227 = vadd.f32 %v1126, %v1219
      %v1228 = vadd.f32 %v1127, %v1220
      %v1229 = vadd.f32 %v1128, %v1221
      %v1230 = vstv %s163
      %v1231 = vmul.f32 %v1230, %v1147
      %v1232 = vmul.f32 %v1230, %v1149
      %v1233 = vmul.f32 %v1230, %v1151
      %v1234 = vmul.f32 %v1230, %v1153
      %v1235 = vmul.f32 %v1230, %v1155
      %v1236 = vmul.f32 %v1230, %v1157
      %v1237 = vmul.f32 %v1230, %v1159
      %v1238 = vmul.f32 %v1230, %v1161
      %v1239 = vadd.f32 %v1138, %v1231
      %v1240 = vadd.f32 %v1139, %v1232
      %v1241 = vadd.f32 %v1140, %v1233
      %v1242 = vadd.f32 %v1141, %v1234
      %v1243 = vadd.f32 %v1142, %v1235
      %v1244 = vadd.f32 %v1143, %v1236
      %v1245 = vadd.f32 %v1144, %v1237
      %v1246 = vadd.f32 %v1145, %v1238
      %v1247 = vrot.slane %v1171, 6
      %v1248 = vrot.slane %v1172, 6
      %v1249 = vrot.slane %v1173, 6
      %v1250 = vrot.slane %v1174, 6
      %v1251 = vrot.slane %v1175, 6
      %v1252 = vrot.slane %v1176, 6
      %v1253 = vrot.slane %v1177, 6
      %v1254 = vrot.slane %v1178, 6
      %v1255 = vsel %vm781, %v1253, %v1254
      %v1256 = vsel %vm781, %v1252, %v1253
      %v1257 = vsel %vm781, %v1251, %v1252
      %v1258 = vsel %vm781, %v1250, %v1251
      %v1259 = vsel %vm781, %v1249, %v1250
      %v1260 = vsel %vm781, %v1248, %v1249
      %v1261 = vsel %vm781, %v1247, %v1248
      %v1262 = vsel %vm781, %v1254, %v1247
      %v1263 = vrot.slane %v1188, 7
      %v1264 = vrot.slane %v1189, 7
      %v1265 = vrot.slane %v1190, 7
      %v1266 = vrot.slane %v1191, 7
      %v1267 = vrot.slane %v1192, 7
      %v1268 = vrot.slane %v1193, 7
      %v1269 = vrot.slane %v1194, 7
      %v1270 = vrot.slane %v1195, 7
      %v1271 = vsel %vm756, %v1269, %v1270
      %v1272 = vsel %vm756, %v1268, %v1269
      %v1273 = vsel %vm756, %v1267, %v1268
      %v1274 = vsel %vm756, %v1266, %v1267
      %v1275 = vsel %vm756, %v1265, %v1266
      %v1276 = vsel %vm756, %v1264, %v1265
      %v1277 = vsel %vm756, %v1263, %v1264
      %v1278 = vsel %vm756, %v1270, %v1263
      %v1279 = vadd.f32 %v1262, %v1278
      %v1280 = vadd.f32 %v1261, %v1277
      %v1281 = vadd.f32 %v1260, %v1276
      %v1282 = vadd.f32 %v1259, %v1275
      %v1283 = vadd.f32 %v1258, %v1274
      %v1284 = vadd.f32 %v1257, %v1273
      %v1285 = vadd.f32 %v1256, %v1272
      %v1286 = vadd.f32 %v1255, %v1271
      %v1287 = vadd.f32 %v1279, %v1205
      %v1288 = vadd.f32 %v1280, %v1206
      %v1289 = vadd.f32 %v1281, %v1207
      %v1290 = vadd.f32 %v1282, %v1208
      %v1291 = vadd.f32 %v1283, %v1209
      %v1292 = vadd.f32 %v1284, %v1210
      %v1293 = vadd.f32 %v1285, %v1211
      %v1294 = vadd.f32 %v1286, %v1212
      %v1295 = vrot.slane %v1222, 1
      %v1296 = vrot.slane %v1223, 1
      %v1297 = vrot.slane %v1224, 1
      %v1298 = vrot.slane %v1225, 1
      %v1299 = vrot.slane %v1226, 1
      %v1300 = vrot.slane %v1227, 1
      %v1301 = vrot.slane %v1228, 1
      %v1302 = vrot.slane %v1229, 1
      %v1303 = vsel %vm723, %v1301, %v1302
      %v1304 = vsel %vm723, %v1300, %v1301
      %v1305 = vsel %vm723, %v1299, %v1300
      %v1306 = vsel %vm723, %v1298, %v1299
      %v1307 = vsel %vm723, %v1297, %v1298
      %v1308 = vsel %vm723, %v1296, %v1297
      %v1309 = vsel %vm723, %v1295, %v1296
      %v1310 = vsel %vm723, %v1302, %v1295
      %v1311 = vadd.f32 %v1287, %v1309
      %v1312 = vadd.f32 %v1288, %v1308
      %v1313 = vadd.f32 %v1289, %v1307
      %v1314 = vadd.f32 %v1290, %v1306
      %v1315 = vadd.f32 %v1291, %v1305
      %v1316 = vadd.f32 %v1292, %v1304
      %v1317 = vadd.f32 %v1293, %v1303
      %v1318 = vadd.f32 %v1294, %v1310
      %v1319 = vrot.slane %v1239, 2
      %v1320 = vrot.slane %v1240, 2
      %v1321 = vrot.slane %v1241, 2
      %v1322 = vrot.slane %v1242, 2
      %v1323 = vrot.slane %v1243, 2
      %v1324 = vrot.slane %v1244, 2
      %v1325 = vrot.slane %v1245, 2
      %v1326 = vrot.slane %v1246, 2
      %v1327 = vsel %vm706, %v1325, %v1326
      %v1328 = vsel %vm706, %v1324, %v1325
      %v1329 = vsel %vm706, %v1323, %v1324
      %v1330 = vsel %vm706, %v1322, %v1323
      %v1331 = vsel %vm706, %v1321, %v1322
      %v1332 = vsel %vm706, %v1320, %v1321
      %v1333 = vsel %vm706, %v1319, %v1320
      %v1334 = vsel %vm706, %v1326, %v1319
      %v1335 = vadd.f32 %v1311, %v1333
      %v1336 = vadd.f32 %v1312, %v1332
      %v1337 = vadd.f32 %v1313, %v1331
      %v1338 = vadd.f32 %v1314, %v1330
      %v1339 = vadd.f32 %v1315, %v1329
      %v1340 = vadd.f32 %v1316, %v1328
      %v1341 = vadd.f32 %v1317, %v1327
      %v1342 = vadd.f32 %v1318, %v1334
      %v1343 = vsel %vm193, %v497, 0.0
      %v1344 = vsel %vm193, %v499, 0.0
      %v1345 = vsel %vm193, %v501, 0.0
      %v1346 = vsel %vm193, %v503, 0.0
      %v1347 = vsel %vm193, %v505, 0.0
      %v1348 = vsel %vm193, %v507, 0.0
      %v1349 = vsel %vm193, %v509, 0.0
      %v1350 = vsel %vm193, %v511, 0.0
      %v1351 = vstv %s164
      %v1352 = vmul.f32 %v1351, %v1343
      %v1353 = vmul.f32 %v1351, %v1344
      %v1354 = vmul.f32 %v1351, %v1345
      %v1355 = vmul.f32 %v1351, %v1346
      %v1356 = vmul.f32 %v1351, %v1347
      %v1357 = vmul.f32 %v1351, %v1348
      %v1358 = vmul.f32 %v1351, %v1349
      %v1359 = vmul.f32 %v1351, %v1350
      %v1360 = vstv %s167
      %v1361 = vmul.f32 %v1360, %v1343
      %v1362 = vmul.f32 %v1360, %v1344
      %v1363 = vmul.f32 %v1360, %v1345
      %v1364 = vmul.f32 %v1360, %v1346
      %v1365 = vmul.f32 %v1360, %v1347
      %v1366 = vmul.f32 %v1360, %v1348
      %v1367 = vmul.f32 %v1360, %v1349
      %v1368 = vmul.f32 %v1360, %v1350
      %v1369 = vstv %s170
      %v1370 = vmul.f32 %v1369, %v1343
      %v1371 = vmul.f32 %v1369, %v1344
      %v1372 = vmul.f32 %v1369, %v1345
      %v1373 = vmul.f32 %v1369, %v1346
      %v1374 = vmul.f32 %v1369, %v1347
      %v1375 = vmul.f32 %v1369, %v1348
      %v1376 = vmul.f32 %v1369, %v1349
      %v1377 = vmul.f32 %v1369, %v1350
      %v1378 = vstv %s165
      %v1379 = vmul.f32 %v1378, %v241
      %v1380 = vmul.f32 %v1378, %v242
      %v1381 = vmul.f32 %v1378, %v243
      %v1382 = vmul.f32 %v1378, %v244
      %v1383 = vmul.f32 %v1378, %v245
      %v1384 = vmul.f32 %v1378, %v246
      %v1385 = vmul.f32 %v1378, %v247
      %v1386 = vmul.f32 %v1378, %v248
      %v1387 = vadd.f32 %v1352, %v1379
      %v1388 = vadd.f32 %v1353, %v1380
      %v1389 = vadd.f32 %v1354, %v1381
      %v1390 = vadd.f32 %v1355, %v1382
      %v1391 = vadd.f32 %v1356, %v1383
      %v1392 = vadd.f32 %v1357, %v1384
      %v1393 = vadd.f32 %v1358, %v1385
      %v1394 = vadd.f32 %v1359, %v1386
      %v1395 = vstv %s168
      %v1396 = vmul.f32 %v1395, %v241
      %v1397 = vmul.f32 %v1395, %v242
      %v1398 = vmul.f32 %v1395, %v243
      %v1399 = vmul.f32 %v1395, %v244
      %v1400 = vmul.f32 %v1395, %v245
      %v1401 = vmul.f32 %v1395, %v246
      %v1402 = vmul.f32 %v1395, %v247
      %v1403 = vmul.f32 %v1395, %v248
      %v1404 = vadd.f32 %v1361, %v1396
      %v1405 = vadd.f32 %v1362, %v1397
      %v1406 = vadd.f32 %v1363, %v1398
      %v1407 = vadd.f32 %v1364, %v1399
      %v1408 = vadd.f32 %v1365, %v1400
      %v1409 = vadd.f32 %v1366, %v1401
      %v1410 = vadd.f32 %v1367, %v1402
      %v1411 = vadd.f32 %v1368, %v1403
      %v1412 = vstv %s171
      %v1413 = vmul.f32 %v1412, %v241
      %v1414 = vmul.f32 %v1412, %v242
      %v1415 = vmul.f32 %v1412, %v243
      %v1416 = vmul.f32 %v1412, %v244
      %v1417 = vmul.f32 %v1412, %v245
      %v1418 = vmul.f32 %v1412, %v246
      %v1419 = vmul.f32 %v1412, %v247
      %v1420 = vmul.f32 %v1412, %v248
      %v1421 = vadd.f32 %v1370, %v1413
      %v1422 = vadd.f32 %v1371, %v1414
      %v1423 = vadd.f32 %v1372, %v1415
      %v1424 = vadd.f32 %v1373, %v1416
      %v1425 = vadd.f32 %v1374, %v1417
      %v1426 = vadd.f32 %v1375, %v1418
      %v1427 = vadd.f32 %v1376, %v1419
      %v1428 = vadd.f32 %v1377, %v1420
      %v1429 = vsel %vm194, %v311, 0.0
      %v1430 = vsel %vm194, %v313, 0.0
      %v1431 = vsel %vm194, %v315, 0.0
      %v1432 = vsel %vm194, %v317, 0.0
      %v1433 = vsel %vm194, %v319, 0.0
      %v1434 = vsel %vm194, %v321, 0.0
      %v1435 = vsel %vm194, %v323, 0.0
      %v1436 = vsel %vm194, %v325, 0.0
      %v1437 = vstv %s166
      %v1438 = vmul.f32 %v1437, %v1429
      %v1439 = vmul.f32 %v1437, %v1430
      %v1440 = vmul.f32 %v1437, %v1431
      %v1441 = vmul.f32 %v1437, %v1432
      %v1442 = vmul.f32 %v1437, %v1433
      %v1443 = vmul.f32 %v1437, %v1434
      %v1444 = vmul.f32 %v1437, %v1435
      %v1445 = vmul.f32 %v1437, %v1436
      %v1446 = vadd.f32 %v1387, %v1438
      %v1447 = vadd.f32 %v1388, %v1439
      %v1448 = vadd.f32 %v1389, %v1440
      %v1449 = vadd.f32 %v1390, %v1441
      %v1450 = vadd.f32 %v1391, %v1442
      %v1451 = vadd.f32 %v1392, %v1443
      %v1452 = vadd.f32 %v1393, %v1444
      %v1453 = vadd.f32 %v1394, %v1445
      %v1454 = vstv %s169
      %v1455 = vmul.f32 %v1454, %v1429
      %v1456 = vmul.f32 %v1454, %v1430
      %v1457 = vmul.f32 %v1454, %v1431
      %v1458 = vmul.f32 %v1454, %v1432
      %v1459 = vmul.f32 %v1454, %v1433
      %v1460 = vmul.f32 %v1454, %v1434
      %v1461 = vmul.f32 %v1454, %v1435
      %v1462 = vmul.f32 %v1454, %v1436
      %v1463 = vadd.f32 %v1404, %v1455
      %v1464 = vadd.f32 %v1405, %v1456
      %v1465 = vadd.f32 %v1406, %v1457
      %v1466 = vadd.f32 %v1407, %v1458
      %v1467 = vadd.f32 %v1408, %v1459
      %v1468 = vadd.f32 %v1409, %v1460
      %v1469 = vadd.f32 %v1410, %v1461
      %v1470 = vadd.f32 %v1411, %v1462
      %v1471 = vstv %s172
      %v1472 = vmul.f32 %v1471, %v1429
      %v1473 = vmul.f32 %v1471, %v1430
      %v1474 = vmul.f32 %v1471, %v1431
      %v1475 = vmul.f32 %v1471, %v1432
      %v1476 = vmul.f32 %v1471, %v1433
      %v1477 = vmul.f32 %v1471, %v1434
      %v1478 = vmul.f32 %v1471, %v1435
      %v1479 = vmul.f32 %v1471, %v1436
      %v1480 = vadd.f32 %v1421, %v1472
      %v1481 = vadd.f32 %v1422, %v1473
      %v1482 = vadd.f32 %v1423, %v1474
      %v1483 = vadd.f32 %v1424, %v1475
      %v1484 = vadd.f32 %v1425, %v1476
      %v1485 = vadd.f32 %v1426, %v1477
      %v1486 = vadd.f32 %v1427, %v1478
      %v1487 = vadd.f32 %v1428, %v1479
      %v1488 = vrot.slane %v1446, 7
      %v1489 = vrot.slane %v1447, 7
      %v1490 = vrot.slane %v1448, 7
      %v1491 = vrot.slane %v1449, 7
      %v1492 = vrot.slane %v1450, 7
      %v1493 = vrot.slane %v1451, 7
      %v1494 = vrot.slane %v1452, 7
      %v1495 = vrot.slane %v1453, 7
      %v1496 = vsel %vm756, %v1494, %v1495
      %v1497 = vsel %vm756, %v1493, %v1494
      %v1498 = vsel %vm756, %v1492, %v1493
      %v1499 = vsel %vm756, %v1491, %v1492
      %v1500 = vsel %vm756, %v1490, %v1491
      %v1501 = vsel %vm756, %v1489, %v1490
      %v1502 = vsel %vm756, %v1488, %v1489
      %v1503 = vsel %vm756, %v1495, %v1488
      %v1504 = vsel %vm195, %v1503, 0.0
      %v1505 = vsel %vm196, %v1502, 0.0
      %v1506 = vsel %vm197, %v1501, 0.0
      %v1507 = vsel %vm198, %v1500, 0.0
      %v1508 = vsel %vm199, %v1499, 0.0
      %v1509 = vsel %vm200, %v1498, 0.0
      %v1510 = vsel %vm201, %v1497, 0.0
      %v1511 = vsel %vm202, %v1496, 0.0
      %v1512 = vadd.f32 %v227, %v1504
      %v1513 = vadd.f32 %v228, %v1505
      %v1514 = vadd.f32 %v229, %v1506
      %v1515 = vadd.f32 %v230, %v1507
      %v1516 = vadd.f32 %v231, %v1508
      %v1517 = vadd.f32 %v232, %v1509
      %v1518 = vadd.f32 %v233, %v1510
      %v1519 = vadd.f32 %v234, %v1511
      %v1520 = vadd.f32 %v1512, %v1463
      %v1521 = vadd.f32 %v1513, %v1464
      %v1522 = vadd.f32 %v1514, %v1465
      %v1523 = vadd.f32 %v1515, %v1466
      %v1524 = vadd.f32 %v1516, %v1467
      %v1525 = vadd.f32 %v1517, %v1468
      %v1526 = vadd.f32 %v1518, %v1469
      %v1527 = vadd.f32 %v1519, %v1470
      %v1528 = vrot.slane %v1480, 1
      %v1529 = vrot.slane %v1481, 1
      %v1530 = vrot.slane %v1482, 1
      %v1531 = vrot.slane %v1483, 1
      %v1532 = vrot.slane %v1484, 1
      %v1533 = vrot.slane %v1485, 1
      %v1534 = vrot.slane %v1486, 1
      %v1535 = vrot.slane %v1487, 1
      %v1536 = vsel %vm723, %v1534, %v1535
      %v1537 = vsel %vm723, %v1533, %v1534
      %v1538 = vsel %vm723, %v1532, %v1533
      %v1539 = vsel %vm723, %v1531, %v1532
      %v1540 = vsel %vm723, %v1530, %v1531
      %v1541 = vsel %vm723, %v1529, %v1530
      %v1542 = vsel %vm723, %v1528, %v1529
      %v1543 = vsel %vm723, %v1535, %v1528
      %v1544 = vsel %vm203, %v1542, 0.0
      %v1545 = vsel %vm204, %v1541, 0.0
      %v1546 = vsel %vm205, %v1540, 0.0
      %v1547 = vsel %vm206, %v1539, 0.0
      %v1548 = vsel %vm207, %v1538, 0.0
      %v1549 = vsel %vm208, %v1537, 0.0
      %v1550 = vsel %vm209, %v1536, 0.0
      %v1551 = vsel %vm210, %v1543, 0.0
      %v1552 = vadd.f32 %v1520, %v1544
      %v1553 = vadd.f32 %v1521, %v1545
      %v1554 = vadd.f32 %v1522, %v1546
      %v1555 = vadd.f32 %v1523, %v1547
      %v1556 = vadd.f32 %v1524, %v1548
      %v1557 = vadd.f32 %v1525, %v1549
      %v1558 = vadd.f32 %v1526, %v1550
      %v1559 = vadd.f32 %v1527, %v1551
      %v1560 = vmul.f32 %v241, 0.9
      %v1561 = vmul.f32 %v242, 0.9
      %v1562 = vmul.f32 %v243, 0.9
      %v1563 = vmul.f32 %v244, 0.9
      %v1564 = vmul.f32 %v245, 0.9
      %v1565 = vmul.f32 %v246, 0.9
      %v1566 = vmul.f32 %v247, 0.9
      %v1567 = vmul.f32 %v248, 0.9
      %v1568 = vadd.f32 %v1560, %v1552
      %v1569 = vadd.f32 %v1561, %v1553
      %v1570 = vadd.f32 %v1562, %v1554
      %v1571 = vadd.f32 %v1563, %v1555
      %v1572 = vadd.f32 %v1564, %v1556
      %v1573 = vadd.f32 %v1565, %v1557
      %v1574 = vadd.f32 %v1566, %v1558
      %v1575 = vadd.f32 %v1567, %v1559
      %v1576 = vadd.f32 %v1568, %v1335
      %v1577 = vadd.f32 %v1569, %v1336
      %v1578 = vadd.f32 %v1570, %v1337
      %v1579 = vadd.f32 %v1571, %v1338
      %v1580 = vadd.f32 %v1572, %v1339
      %v1581 = vadd.f32 %v1573, %v1340
      %v1582 = vadd.f32 %v1574, %v1341
      %v1583 = vadd.f32 %v1575, %v1342
      %1584 = vst [vmem:[#allocation15] sm:$0xff] %v1576
      %1585 = vst [vmem:[#allocation15 + $0x8] sm:$0xff] %v1577
      %1586 = vst [vmem:[#allocation15 + $0x10] sm:$0xff] %v1578
      %1587 = vst [vmem:[#allocation15 + $0x18] sm:$0xff] %v1579
      %1588 = vst [vmem:[#allocation15 + $0x20] sm:$0xff] %v1580
      %1589 = vst [vmem:[#allocation15 + $0x28] sm:$0xff] %v1581
      %1590 = vst [vmem:[#allocation15 + $0x30] sm:$0xff] %v1582
      %1591 = vst [vmem:[#allocation15 + $0x38] sm:$0xff] %v1583
    $region62: #{tpu_custom_call.1} parent=1 // loop_footer
      %s240 = sadd.s32 1, %s236
    $region63: #{tpu_custom_call.1} parent=1 // loop_footer_branch
      %235 = sbr.rel target = $region59
    $region64: #{tpu_custom_call.1} parent=1 // loop_exit
      _
    %v1592 = vld [vmem:[#allocation15] sm:$0xff]
    %v1593 = vld [vmem:[#allocation15 + $0x8] sm:$0xff]
    %v1594 = vld [vmem:[#allocation15 + $0x10] sm:$0xff]
    %v1595 = vld [vmem:[#allocation15 + $0x18] sm:$0xff]
    %v1596 = vld [vmem:[#allocation15 + $0x20] sm:$0xff]
    %v1597 = vld [vmem:[#allocation15 + $0x28] sm:$0xff]
    %v1598 = vld [vmem:[#allocation15 + $0x30] sm:$0xff]
    %v1599 = vld [vmem:[#allocation15 + $0x38] sm:$0xff]
    %v1600 = vld [vmem:[#allocation14] sm:$0xff]
    %v1601 = vld [vmem:[#allocation14 + $0x8] sm:$0xff]
    %v1602 = vld [vmem:[#allocation14 + $0x10] sm:$0xff]
    %v1603 = vld [vmem:[#allocation14 + $0x18] sm:$0xff]
    %v1604 = vld [vmem:[#allocation14 + $0x20] sm:$0xff]
    %v1605 = vld [vmem:[#allocation14 + $0x28] sm:$0xff]
    %v1606 = vld [vmem:[#allocation14 + $0x30] sm:$0xff]
    %v1607 = vld [vmem:[#allocation14 + $0x38] sm:$0xff]
    %1608 = vrot.lane.b32.xlu0 %v1592, 1
    %v1609 = vpop.permute.xlu0 %1608
    %1610 = vrot.lane.b32.xlu0 %v1593, 1
    %v1611 = vpop.permute.xlu0 %1610
    %1612 = vrot.lane.b32.xlu0 %v1594, 1
    %v1613 = vpop.permute.xlu0 %1612
    %1614 = vrot.lane.b32.xlu0 %v1595, 1
    %v1615 = vpop.permute.xlu0 %1614
    %1616 = vrot.lane.b32.xlu0 %v1596, 1
    %v1617 = vpop.permute.xlu0 %1616
    %1618 = vrot.lane.b32.xlu0 %v1597, 1
    %v1619 = vpop.permute.xlu0 %1618
    %1620 = vrot.lane.b32.xlu0 %v1598, 1
    %v1621 = vpop.permute.xlu0 %1620
    %1622 = vrot.lane.b32.xlu0 %v1599, 1
    %v1623 = vpop.permute.xlu0 %1622
    %v1624 = vsel %vm193, %v1609, 0.0
    %v1625 = vsel %vm193, %v1611, 0.0
    %v1626 = vsel %vm193, %v1613, 0.0
    %v1627 = vsel %vm193, %v1615, 0.0
    %v1628 = vsel %vm193, %v1617, 0.0
    %v1629 = vsel %vm193, %v1619, 0.0
    %v1630 = vsel %vm193, %v1621, 0.0
    %v1631 = vsel %vm193, %v1623, 0.0
    %v1632 = vstv %s173
    %v1633 = vmul.f32 %v1632, %v1624
    %v1634 = vmul.f32 %v1632, %v1625
    %v1635 = vmul.f32 %v1632, %v1626
    %v1636 = vmul.f32 %v1632, %v1627
    %v1637 = vmul.f32 %v1632, %v1628
    %v1638 = vmul.f32 %v1632, %v1629
    %v1639 = vmul.f32 %v1632, %v1630
    %v1640 = vmul.f32 %v1632, %v1631
    %v1641 = vstv %s176
    %v1642 = vmul.f32 %v1641, %v1624
    %v1643 = vmul.f32 %v1641, %v1625
    %v1644 = vmul.f32 %v1641, %v1626
    %v1645 = vmul.f32 %v1641, %v1627
    %v1646 = vmul.f32 %v1641, %v1628
    %v1647 = vmul.f32 %v1641, %v1629
    %v1648 = vmul.f32 %v1641, %v1630
    %v1649 = vmul.f32 %v1641, %v1631
    %v1650 = vstv %s179
    %v1651 = vmul.f32 %v1650, %v1624
    %v1652 = vmul.f32 %v1650, %v1625
    %v1653 = vmul.f32 %v1650, %v1626
    %v1654 = vmul.f32 %v1650, %v1627
    %v1655 = vmul.f32 %v1650, %v1628
    %v1656 = vmul.f32 %v1650, %v1629
    %v1657 = vmul.f32 %v1650, %v1630
    %v1658 = vmul.f32 %v1650, %v1631
    %v1659 = vstv %s174
    %v1660 = vmul.f32 %v1659, %v1592
    %v1661 = vmul.f32 %v1659, %v1593
    %v1662 = vmul.f32 %v1659, %v1594
    %v1663 = vmul.f32 %v1659, %v1595
    %v1664 = vmul.f32 %v1659, %v1596
    %v1665 = vmul.f32 %v1659, %v1597
    %v1666 = vmul.f32 %v1659, %v1598
    %v1667 = vmul.f32 %v1659, %v1599
    %v1668 = vadd.f32 %v1633, %v1660
    %v1669 = vadd.f32 %v1634, %v1661
    %v1670 = vadd.f32 %v1635, %v1662
    %v1671 = vadd.f32 %v1636, %v1663
    %v1672 = vadd.f32 %v1637, %v1664
    %v1673 = vadd.f32 %v1638, %v1665
    %v1674 = vadd.f32 %v1639, %v1666
    %v1675 = vadd.f32 %v1640, %v1667
    %v1676 = vstv %s177
    %v1677 = vmul.f32 %v1676, %v1592
    %v1678 = vmul.f32 %v1676, %v1593
    %v1679 = vmul.f32 %v1676, %v1594
    %v1680 = vmul.f32 %v1676, %v1595
    %v1681 = vmul.f32 %v1676, %v1596
    %v1682 = vmul.f32 %v1676, %v1597
    %v1683 = vmul.f32 %v1676, %v1598
    %v1684 = vmul.f32 %v1676, %v1599
    %v1685 = vadd.f32 %v1642, %v1677
    %v1686 = vadd.f32 %v1643, %v1678
    %v1687 = vadd.f32 %v1644, %v1679
    %v1688 = vadd.f32 %v1645, %v1680
    %v1689 = vadd.f32 %v1646, %v1681
    %v1690 = vadd.f32 %v1647, %v1682
    %v1691 = vadd.f32 %v1648, %v1683
    %v1692 = vadd.f32 %v1649, %v1684
    %v1693 = vstv %s180
    %v1694 = vmul.f32 %v1693, %v1592
    %v1695 = vmul.f32 %v1693, %v1593
    %v1696 = vmul.f32 %v1693, %v1594
    %v1697 = vmul.f32 %v1693, %v1595
    %v1698 = vmul.f32 %v1693, %v1596
    %v1699 = vmul.f32 %v1693, %v1597
    %v1700 = vmul.f32 %v1693, %v1598
    %v1701 = vmul.f32 %v1693, %v1599
    %v1702 = vadd.f32 %v1651, %v1694
    %v1703 = vadd.f32 %v1652, %v1695
    %v1704 = vadd.f32 %v1653, %v1696
    %v1705 = vadd.f32 %v1654, %v1697
    %v1706 = vadd.f32 %v1655, %v1698
    %v1707 = vadd.f32 %v1656, %v1699
    %v1708 = vadd.f32 %v1657, %v1700
    %v1709 = vadd.f32 %v1658, %v1701
    %1710 = vrot.lane.b32.xlu0 %v1592, 127
    %v1711 = vpop.permute.xlu0 %1710
    %1712 = vrot.lane.b32.xlu0 %v1593, 127
    %v1713 = vpop.permute.xlu0 %1712
    %1714 = vrot.lane.b32.xlu0 %v1594, 127
    %v1715 = vpop.permute.xlu0 %1714
    %1716 = vrot.lane.b32.xlu0 %v1595, 127
    %v1717 = vpop.permute.xlu0 %1716
    %1718 = vrot.lane.b32.xlu0 %v1596, 127
    %v1719 = vpop.permute.xlu0 %1718
    %1720 = vrot.lane.b32.xlu0 %v1597, 127
    %v1721 = vpop.permute.xlu0 %1720
    %1722 = vrot.lane.b32.xlu0 %v1598, 127
    %v1723 = vpop.permute.xlu0 %1722
    %1724 = vrot.lane.b32.xlu0 %v1599, 127
    %v1725 = vpop.permute.xlu0 %1724
    %v1726 = vsel %vm194, %v1711, 0.0
    %v1727 = vsel %vm194, %v1713, 0.0
    %v1728 = vsel %vm194, %v1715, 0.0
    %v1729 = vsel %vm194, %v1717, 0.0
    %v1730 = vsel %vm194, %v1719, 0.0
    %v1731 = vsel %vm194, %v1721, 0.0
    %v1732 = vsel %vm194, %v1723, 0.0
    %v1733 = vsel %vm194, %v1725, 0.0
    %v1734 = vstv %s175
    %v1735 = vmul.f32 %v1734, %v1726
    %v1736 = vmul.f32 %v1734, %v1727
    %v1737 = vmul.f32 %v1734, %v1728
    %v1738 = vmul.f32 %v1734, %v1729
    %v1739 = vmul.f32 %v1734, %v1730
    %v1740 = vmul.f32 %v1734, %v1731
    %v1741 = vmul.f32 %v1734, %v1732
    %v1742 = vmul.f32 %v1734, %v1733
    %v1743 = vadd.f32 %v1668, %v1735
    %v1744 = vadd.f32 %v1669, %v1736
    %v1745 = vadd.f32 %v1670, %v1737
    %v1746 = vadd.f32 %v1671, %v1738
    %v1747 = vadd.f32 %v1672, %v1739
    %v1748 = vadd.f32 %v1673, %v1740
    %v1749 = vadd.f32 %v1674, %v1741
    %v1750 = vadd.f32 %v1675, %v1742
    %v1751 = vstv %s178
    %v1752 = vmul.f32 %v1751, %v1726
    %v1753 = vmul.f32 %v1751, %v1727
    %v1754 = vmul.f32 %v1751, %v1728
    %v1755 = vmul.f32 %v1751, %v1729
    %v1756 = vmul.f32 %v1751, %v1730
    %v1757 = vmul.f32 %v1751, %v1731
    %v1758 = vmul.f32 %v1751, %v1732
    %v1759 = vmul.f32 %v1751, %v1733
    %v1760 = vadd.f32 %v1685, %v1752
    %v1761 = vadd.f32 %v1686, %v1753
    %v1762 = vadd.f32 %v1687, %v1754
    %v1763 = vadd.f32 %v1688, %v1755
    %v1764 = vadd.f32 %v1689, %v1756
    %v1765 = vadd.f32 %v1690, %v1757
    %v1766 = vadd.f32 %v1691, %v1758
    %v1767 = vadd.f32 %v1692, %v1759
    %v1768 = vstv %s181
    %v1769 = vmul.f32 %v1768, %v1726
    %v1770 = vmul.f32 %v1768, %v1727
    %v1771 = vmul.f32 %v1768, %v1728
    %v1772 = vmul.f32 %v1768, %v1729
    %v1773 = vmul.f32 %v1768, %v1730
    %v1774 = vmul.f32 %v1768, %v1731
    %v1775 = vmul.f32 %v1768, %v1732
    %v1776 = vmul.f32 %v1768, %v1733
    %v1777 = vadd.f32 %v1702, %v1769
    %v1778 = vadd.f32 %v1703, %v1770
    %v1779 = vadd.f32 %v1704, %v1771
    %v1780 = vadd.f32 %v1705, %v1772
    %v1781 = vadd.f32 %v1706, %v1773
    %v1782 = vadd.f32 %v1707, %v1774
    %v1783 = vadd.f32 %v1708, %v1775
    %v1784 = vadd.f32 %v1709, %v1776
    %v1785 = vrot.slane %v1743, 7
    %v1786 = vrot.slane %v1744, 7
    %v1787 = vrot.slane %v1745, 7
    %v1788 = vrot.slane %v1746, 7
    %v1789 = vrot.slane %v1747, 7
    %v1790 = vrot.slane %v1748, 7
    %v1791 = vrot.slane %v1749, 7
    %v1792 = vrot.slane %v1750, 7
    %vm1793 = vcmp.lt.s32.totalorder %v183, 1
    %v1794 = vsel %vm1793, %v1791, %v1792
    %v1795 = vsel %vm1793, %v1790, %v1791
    %v1796 = vsel %vm1793, %v1789, %v1790
    %v1797 = vsel %vm1793, %v1788, %v1789
    %v1798 = vsel %vm1793, %v1787, %v1788
    %v1799 = vsel %vm1793, %v1786, %v1787
    %v1800 = vsel %vm1793, %v1785, %v1786
    %v1801 = vsel %vm1793, %v1792, %v1785
    %v1802 = vsel %vm195, %v1801, 0.0
    %v1803 = vsel %vm196, %v1800, 0.0
    %v1804 = vsel %vm197, %v1799, 0.0
    %v1805 = vsel %vm198, %v1798, 0.0
    %v1806 = vsel %vm199, %v1797, 0.0
    %v1807 = vsel %vm200, %v1796, 0.0
    %v1808 = vsel %vm201, %v1795, 0.0
    %v1809 = vsel %vm202, %v1794, 0.0
    %v1810 = vadd.f32 %v1600, %v1802
    %v1811 = vadd.f32 %v1601, %v1803
    %v1812 = vadd.f32 %v1602, %v1804
    %v1813 = vadd.f32 %v1603, %v1805
    %v1814 = vadd.f32 %v1604, %v1806
    %v1815 = vadd.f32 %v1605, %v1807
    %v1816 = vadd.f32 %v1606, %v1808
    %v1817 = vadd.f32 %v1607, %v1809
    %v1818 = vadd.f32 %v1810, %v1760
    %v1819 = vadd.f32 %v1811, %v1761
    %v1820 = vadd.f32 %v1812, %v1762
    %v1821 = vadd.f32 %v1813, %v1763
    %v1822 = vadd.f32 %v1814, %v1764
    %v1823 = vadd.f32 %v1815, %v1765
    %v1824 = vadd.f32 %v1816, %v1766
    %v1825 = vadd.f32 %v1817, %v1767
    %v1826 = vrot.slane %v1777, 1
    %v1827 = vrot.slane %v1778, 1
    %v1828 = vrot.slane %v1779, 1
    %v1829 = vrot.slane %v1780, 1
    %v1830 = vrot.slane %v1781, 1
    %v1831 = vrot.slane %v1782, 1
    %v1832 = vrot.slane %v1783, 1
    %v1833 = vrot.slane %v1784, 1
    %vm1834 = vcmp.lt.s32.totalorder %v183, 7
    %v1835 = vsel %vm1834, %v1832, %v1833
    %v1836 = vsel %vm1834, %v1831, %v1832
    %v1837 = vsel %vm1834, %v1830, %v1831
    %v1838 = vsel %vm1834, %v1829, %v1830
    %v1839 = vsel %vm1834, %v1828, %v1829
    %v1840 = vsel %vm1834, %v1827, %v1828
    %v1841 = vsel %vm1834, %v1826, %v1827
    %v1842 = vsel %vm1834, %v1833, %v1826
    %v1843 = vsel %vm203, %v1841, 0.0
    %v1844 = vsel %vm204, %v1840, 0.0
    %v1845 = vsel %vm205, %v1839, 0.0
    %v1846 = vsel %vm206, %v1838, 0.0
    %v1847 = vsel %vm207, %v1837, 0.0
    %v1848 = vsel %vm208, %v1836, 0.0
    %v1849 = vsel %vm209, %v1835, 0.0
    %v1850 = vsel %vm210, %v1842, 0.0
    %v1851 = vadd.f32 %v1818, %v1843
    %v1852 = vadd.f32 %v1819, %v1844
    %v1853 = vadd.f32 %v1820, %v1845
    %v1854 = vadd.f32 %v1821, %v1846
    %v1855 = vadd.f32 %v1822, %v1847
    %v1856 = vadd.f32 %v1823, %v1848
    %v1857 = vadd.f32 %v1824, %v1849
    %v1858 = vadd.f32 %v1825, %v1850
    %1859 = vst [vmem:[#allocation15] sm:$0xff] %v1851
    %1860 = vst [vmem:[#allocation15 + $0x8] sm:$0xff] %v1852
    %1861 = vst [vmem:[#allocation15 + $0x10] sm:$0xff] %v1853
    %1862 = vst [vmem:[#allocation15 + $0x18] sm:$0xff] %v1854
    %1863 = vst [vmem:[#allocation15 + $0x20] sm:$0xff] %v1855
    %1864 = vst [vmem:[#allocation15 + $0x28] sm:$0xff] %v1856
    %1865 = vst [vmem:[#allocation15 + $0x30] sm:$0xff] %v1857
    %1866 = vst [vmem:[#allocation15 + $0x38] sm:$0xff] %v1858
    // Predicated region
    $region65: #{tpu_custom_call.1} parent=1 // pred_check
      _
    $region66: #{tpu_custom_call.1} parent=1 // pred_check_branch
      %1868 = sbr.rel (0) target = $region68
    $region67: #{tpu_custom_call.1} parent=1 // pred_region
      %s1870 = ssub.s32 1024, 1024
      %1871 = vsyncadd [#allocation4], %s1870
      %s1872 = sshll.u32 [#allocation15], 4
      %s1873 = int_to_ptr.vmem [resolvable:$true] %s1872
      %1878 = dma.vmem_to_hbm [thread:$0]  %s1873, 1024, %s7, [#allocation4], 128, 128, 8
    $region68: #{tpu_custom_call.1} parent=1 // pred_fallthru
      _
    // Predicated region
    $region69: #{tpu_custom_call.1} parent=1 // pred_check
      _
    $region70: #{tpu_custom_call.1} parent=1 // pred_check_branch
      %1880 = sbr.rel (0) target = $region72
    $region71: #{tpu_custom_call.1} parent=1 // pred_region
      %1881 = dma.done [#allocation4], 1024
    $region72: #{tpu_custom_call.1} parent=1 // pred_fallthru
      _
    %1882 = vsyncpa [#allocation3], 1
    %1883 = vsyncpa [#allocation13], 1
    %1884 = vsyncpa [#allocation4], 1
    %1885 = vsyncpa [#allocation5], 1
    %1886 = vsyncpa [#allocation6], 1
    %1887 = vsyncpa [#allocation9], 1

</llo_original>
